<compile_context>
chip_gen: v6e
topology: v6e:2x2x1
jax: 0.10.0
libtpu: 0.0.40
codegen_flags: <defaults>
</compile_context>

<pallas_src>
import functools

import numpy as np
import jax
import jax.numpy as jnp
from jax.experimental import pallas as pl
from jax.experimental.pallas import tpu as pltpu

# Make the pure-JAX reference matmuls run at full f32 precision so the
# tolerance check against the in-kernel MXU f32 dots is tight.
jax.config.update("jax_default_matmul_precision", "highest")


def _pw_linear_kernel(xc_ref, xt_ref,
                      w1_ref, b1_ref, w2_ref, b2_ref, w3_ref, b3_ref,
                      zt_ref, logdet_ref, *, n_bins):
    xc = xc_ref[...].astype(jnp.float32)            # (B, d_c)
    xt = xt_ref[...].astype(jnp.float32)            # (B, d_t)

    # FCNN with num_hidden_layers=2: Linear -> Linear -> ReLU -> Linear
    # (note: no activation after the first Linear, exactly as in the torch code).
    h = jnp.dot(xc, w1_ref[...], preferred_element_type=jnp.float32) + b1_ref[...]
    h = jnp.dot(h, w2_ref[...], preferred_element_type=jnp.float32) + b2_ref[...]
    h = jnp.maximum(h, 0.0)
    logits = jnp.dot(h, w3_ref[...], preferred_element_type=jnp.float32) + b3_ref[...]
    # logits: (B, d_t * K)

    # softmax over the flattened last axis (matches F.softmax(W, dim=-1) on (B, d_t*K))
    m = jnp.max(logits, axis=-1, keepdims=True)
    e = jnp.exp(logits - m)
    w_n = e / jnp.sum(e, axis=-1, keepdims=True)    # (B, d_t*K)

    K = float(n_bins)
    xtK = xt * K
    b_f = jnp.floor(xtK)
    alpha = xtK - b_f                               # (B, d_t)
    b_i = b_f.astype(jnp.int32)                     # bin indices in [0, K)

    B, KD = w_n.shape
    d_t = xt.shape[1]
    k_iota = jax.lax.broadcasted_iota(jnp.int32, (B, KD), 1)

    # Replace torch.gather + cumsum with masked lane reductions (no lane gather, no scan).
    zt_cols = []
    logdet = jnp.zeros((B, 1), jnp.float32)
    for j in range(d_t):                            # d_t is tiny & static -> trace-time unroll
        bj = b_i[:, j:j + 1]                        # (B, 1)
        aj = alpha[:, j:j + 1]                      # (B, 1)
        w_bj = jnp.sum(jnp.where(k_iota == bj, w_n, 0.0), axis=-1, keepdims=True)  # gather(W_n, b)
        c_bj = jnp.sum(jnp.where(k_iota < bj, w_n, 0.0), axis=-1, keepdims=True)   # gather(cdf,  b)
        zt_cols.append(aj * w_bj + c_bj)
        logdet = logdet + jnp.log(w_bj * K)

    zt_ref[...] = jnp.concatenate(zt_cols, axis=-1).astype(zt_ref.dtype)
    logdet_ref[...] = logdet                        # single (B, 1) store at the end


def pw_linear_forward(x, params, mask, n_bins):
    """x: (B, n_dim) f32 in [0,1).  mask: static 0/1 array of length n_dim."""
    mask = np.asarray(mask)
    idx = np.arange(mask.shape[0])
    idx_c = idx[mask == 0]
    idx_t = idx[mask == 1]
    B, _ = x.shape
    d_t = len(idx_t)

    # Static mask split (layout plumbing, kept outside the kernel so the kernel
    # body never performs data-dependent lane shuffles).
    x_c = x[:, idx_c]
    x_t = x[:, idx_t]

    kernel = functools.partial(_pw_linear_kernel, n_bins=n_bins)
    vmem = pl.BlockSpec(memory_space=pltpu.MemorySpace.VMEM)

    z_t, logdet = pl.pallas_call(
        kernel,
        out_shape=(
            jax.ShapeDtypeStruct((B, d_t), x.dtype),
            jax.ShapeDtypeStruct((B, 1), jnp.float32),
        ),
        in_specs=[vmem] * 8,
        out_specs=(vmem, vmem),
    )(x_c, x_t,
      params["w1"], params["b1"], params["w2"], params["b2"],
      params["w3"], params["b3"])

    # Static scatter back to the original column order (z[:, copied] = x_c, z[:, transformed] = z_t).
    z = jnp.zeros_like(x)
    z = z.at[:, idx_c].set(x_c)
    z = z.at[:, idx_t].set(z_t)
    return z, logdet[:, 0]


def pw_linear_reference(x, params, mask, n_bins):
    """Pure-JAX mirror of PW_Linear.forward (cumsum + pad + gather formulation)."""
    mask = np.asarray(mask)
    idx = np.arange(mask.shape[0])
    idx_c, idx_t = idx[mask == 0], idx[mask == 1]
    x_c, x_t = x[:, idx_c], x[:, idx_t]

    h = x_c @ params["w1"] + params["b1"]
    h = h @ params["w2"] + params["b2"]
    h = jnp.maximum(h, 0.0)
    W = h @ params["w3"] + params["b3"]

    W_n = jax.nn.softmax(W.astype(jnp.float32), axis=-1)
    K = n_bins
    b = jnp.floor(x_t * K).astype(jnp.int32)
    alpha = x_t * K - b
    W_cum = jnp.cumsum(W_n, axis=-1)
    W_cum = jnp.pad(W_cum, ((0, 0), (1, 0)))
    w_b = jnp.take_along_axis(W_n, b, axis=-1)
    cdf_b = jnp.take_along_axis(W_cum, b, axis=-1)
    z_t = alpha * w_b + cdf_b
    log_det = jnp.log(w_b * K).sum(axis=-1)

    z = jnp.zeros_like(x)
    z = z.at[:, idx_c].set(x_c)
    z = z.at[:, idx_t].set(z_t)
    return z, log_det


def init_params(key, d_c, hidden, out_size):
    ks = jax.random.split(key, 6)
    s = 0.1
    return {
        "w1": s * jax.random.normal(ks[0], (d_c, hidden), jnp.float32),
        "b1": s * jax.random.normal(ks[1], (1, hidden), jnp.float32),
        "w2": s * jax.random.normal(ks[2], (hidden, hidden), jnp.float32),
        "b2": s * jax.random.normal(ks[3], (1, hidden), jnp.float32),
        "w3": s * jax.random.normal(ks[4], (hidden, out_size), jnp.float32),
        "b3": s * jax.random.normal(ks[5], (1, out_size), jnp.float32),
    }


if __name__ == "__main__":
    B = 8
    mask = np.array([0, 1, 0, 1], dtype=np.int32)   # copied dims: 0,2 ; transformed dims: 1,3
    n_bins = 8
    hidden_size = 32
    n_dim = mask.shape[0]
    d_c = int((mask == 0).sum())
    d_t = int((mask == 1).sum())
    out_size = d_t * n_bins

    key = jax.random.PRNGKey(0)
    kx, kp = jax.random.split(key)
    x = jax.random.uniform(kx, (B, n_dim), jnp.float32)   # unit hypercube, as expected by the flow
    params = init_params(kp, d_c, hidden_size, out_size)

    z, logdet = pw_linear_forward(x, params, mask, n_bins)
    jax.block_until_ready((z, logdet))

    z_ref, logdet_ref = pw_linear_reference(x, params, mask, n_bins)
    assert z.shape == (B, n_dim) and logdet.shape == (B,)
    assert jnp.allclose(z, z_ref, atol=1e-4, rtol=1e-4)
    assert jnp.allclose(logdet, logdet_ref, atol=1e-4, rtol=1e-4)

    print("KERNEL_OK")
</pallas_src>

<mosaic_0001>
module attributes {stable_mosaic.version = 11 : i64} {
  func.func @_pw_linear_kernel(%arg0: memref<8x2xf32, #tpu.memory_space<vmem>>, %arg1: memref<8x2xf32, #tpu.memory_space<vmem>>, %arg2: memref<2x32xf32, #tpu.memory_space<vmem>>, %arg3: memref<1x32xf32, #tpu.memory_space<vmem>>, %arg4: memref<32x32xf32, #tpu.memory_space<vmem>>, %arg5: memref<1x32xf32, #tpu.memory_space<vmem>>, %arg6: memref<32x16xf32, #tpu.memory_space<vmem>>, %arg7: memref<1x16xf32, #tpu.memory_space<vmem>>, %arg8: memref<8x2xf32, #tpu.memory_space<vmem>>, %arg9: memref<8x1xf32, #tpu.memory_space<vmem>>) attributes {dimension_semantics = [], scalar_prefetch = 0 : i64, scratch_operands = 0 : i64, tpu.core_type = #tpu.core_type<tc>} {
    %c0 = arith.constant 0 : index
    %c0_0 = arith.constant 0 : index
    %0 = vector.load %arg0[%c0, %c0_0] : memref<8x2xf32, #tpu.memory_space<vmem>>, vector<8x2xf32>
    %c0_1 = arith.constant 0 : index
    %c0_2 = arith.constant 0 : index
    %1 = vector.load %arg1[%c0_1, %c0_2] : memref<8x2xf32, #tpu.memory_space<vmem>>, vector<8x2xf32>
    %c0_3 = arith.constant 0 : index
    %c0_4 = arith.constant 0 : index
    %2 = vector.load %arg2[%c0_3, %c0_4] : memref<2x32xf32, #tpu.memory_space<vmem>>, vector<2x32xf32>
    %cst = arith.constant dense<0.000000e+00> : vector<8x32xf32>
    %3 = tpu.matmul %0, %2, %cst {dimension_numbers = #tpu.dot_dimension_numbers<[1], [0], [0], [1], [0, 0, 1, 1], [], []>, precision = #tpu.contract_precision<fp32>} : vector<8x2xf32>, vector<2x32xf32>, vector<8x32xf32> -> vector<8x32xf32>
    %c0_5 = arith.constant 0 : index
    %c0_6 = arith.constant 0 : index
    %4 = vector.load %arg3[%c0_5, %c0_6] : memref<1x32xf32, #tpu.memory_space<vmem>>, vector<1x32xf32>
    %5 = vector.broadcast %4 : vector<1x32xf32> to vector<8x32xf32>
    %6 = arith.addf %3, %5 : vector<8x32xf32>
    %c0_7 = arith.constant 0 : index
    %c0_8 = arith.constant 0 : index
    %7 = vector.load %arg4[%c0_7, %c0_8] : memref<32x32xf32, #tpu.memory_space<vmem>>, vector<32x32xf32>
    %cst_9 = arith.constant dense<0.000000e+00> : vector<8x32xf32>
    %8 = tpu.matmul %6, %7, %cst_9 {dimension_numbers = #tpu.dot_dimension_numbers<[1], [0], [0], [1], [0, 0, 1, 1], [], []>, precision = #tpu.contract_precision<fp32>} : vector<8x32xf32>, vector<32x32xf32>, vector<8x32xf32> -> vector<8x32xf32>
    %c0_10 = arith.constant 0 : index
    %c0_11 = arith.constant 0 : index
    %9 = vector.load %arg5[%c0_10, %c0_11] : memref<1x32xf32, #tpu.memory_space<vmem>>, vector<1x32xf32>
    %10 = vector.broadcast %9 : vector<1x32xf32> to vector<8x32xf32>
    %11 = arith.addf %8, %10 : vector<8x32xf32>
    %cst_12 = arith.constant 0.000000e+00 : f32
    %12 = vector.broadcast %cst_12 : f32 to vector<8x32xf32>
    %13 = arith.maximumf %11, %12 : vector<8x32xf32>
    %c0_13 = arith.constant 0 : index
    %c0_14 = arith.constant 0 : index
    %14 = vector.load %arg6[%c0_13, %c0_14] : memref<32x16xf32, #tpu.memory_space<vmem>>, vector<32x16xf32>
    %cst_15 = arith.constant dense<0.000000e+00> : vector<8x16xf32>
    %15 = tpu.matmul %13, %14, %cst_15 {dimension_numbers = #tpu.dot_dimension_numbers<[1], [0], [0], [1], [0, 0, 1, 1], [], []>, precision = #tpu.contract_precision<fp32>} : vector<8x32xf32>, vector<32x16xf32>, vector<8x16xf32> -> vector<8x16xf32>
    %c0_16 = arith.constant 0 : index
    %c0_17 = arith.constant 0 : index
    %16 = vector.load %arg7[%c0_16, %c0_17] : memref<1x16xf32, #tpu.memory_space<vmem>>, vector<1x16xf32>
    %17 = vector.broadcast %16 : vector<1x16xf32> to vector<8x16xf32>
    %18 = arith.addf %15, %17 : vector<8x16xf32>
    %cst_18 = arith.constant dense<0xFF800000> : vector<8xf32>
    %19 = vector.multi_reduction <maximumf>, %18, %cst_18 [1] : vector<8x16xf32> to vector<8xf32>
    %20 = vector.shape_cast %19 : vector<8xf32> to vector<8x1xf32>
    %21 = vector.broadcast %20 : vector<8x1xf32> to vector<8x16xf32>
    %22 = arith.subf %18, %21 : vector<8x16xf32>
    %23 = math.exp %22 : vector<8x16xf32>
    %cst_19 = arith.constant dense<0.000000e+00> : vector<8xf32>
    %24 = vector.multi_reduction <add>, %23, %cst_19 [1] : vector<8x16xf32> to vector<8xf32>
    %25 = vector.shape_cast %24 : vector<8xf32> to vector<8x1xf32>
    %26 = vector.broadcast %25 : vector<8x1xf32> to vector<8x16xf32>
    %27 = arith.divf %23, %26 : vector<8x16xf32>
    %cst_20 = arith.constant 8.000000e+00 : f32
    %28 = vector.broadcast %cst_20 : f32 to vector<8x2xf32>
    %29 = arith.mulf %1, %28 : vector<8x2xf32>
    %30 = math.floor %29 : vector<8x2xf32>
    %31 = arith.subf %29, %30 : vector<8x2xf32>
    %32 = arith.fptosi %30 : vector<8x2xf32> to vector<8x2xi32>
    %33 = tpu.iota {dimensions = array<i32: 1>} : vector<8x16xi32>
    %cst_21 = arith.constant 0.000000e+00 : f32
    %34 = vector.broadcast %cst_21 : f32 to vector<8x1xf32>
    %35 = vector.extract_strided_slice %32 {offsets = [0, 0], sizes = [8, 1], strides = [1, 1]} : vector<8x2xi32> to vector<8x1xi32>
    %36 = vector.extract_strided_slice %31 {offsets = [0, 0], sizes = [8, 1], strides = [1, 1]} : vector<8x2xf32> to vector<8x1xf32>
    %37 = vector.broadcast %35 : vector<8x1xi32> to vector<8x16xi32>
    %38 = arith.cmpi eq, %33, %37 : vector<8x16xi32>
    %cst_22 = arith.constant 0.000000e+00 : f32
    %39 = vector.broadcast %cst_22 : f32 to vector<8x16xf32>
    %40 = arith.select %38, %27, %39 : vector<8x16xi1>, vector<8x16xf32>
    %cst_23 = arith.constant dense<0.000000e+00> : vector<8xf32>
    %41 = vector.multi_reduction <add>, %40, %cst_23 [1] : vector<8x16xf32> to vector<8xf32>
    %42 = vector.shape_cast %41 : vector<8xf32> to vector<8x1xf32>
    %43 = vector.broadcast %35 : vector<8x1xi32> to vector<8x16xi32>
    %44 = arith.cmpi slt, %33, %43 : vector<8x16xi32>
    %cst_24 = arith.constant 0.000000e+00 : f32
    %45 = vector.broadcast %cst_24 : f32 to vector<8x16xf32>
    %46 = arith.select %44, %27, %45 : vector<8x16xi1>, vector<8x16xf32>
    %cst_25 = arith.constant dense<0.000000e+00> : vector<8xf32>
    %47 = vector.multi_reduction <add>, %46, %cst_25 [1] : vector<8x16xf32> to vector<8xf32>
    %48 = vector.shape_cast %47 : vector<8xf32> to vector<8x1xf32>
    %49 = arith.mulf %36, %42 : vector<8x1xf32>
    %50 = arith.addf %49, %48 : vector<8x1xf32>
    %cst_26 = arith.constant 8.000000e+00 : f32
    %51 = vector.broadcast %cst_26 : f32 to vector<8x1xf32>
    %52 = arith.mulf %42, %51 : vector<8x1xf32>
    %53 = math.log %52 : vector<8x1xf32>
    %54 = arith.addf %34, %53 : vector<8x1xf32>
    %55 = vector.extract_strided_slice %32 {offsets = [0, 1], sizes = [8, 1], strides = [1, 1]} : vector<8x2xi32> to vector<8x1xi32>
    %56 = vector.extract_strided_slice %31 {offsets = [0, 1], sizes = [8, 1], strides = [1, 1]} : vector<8x2xf32> to vector<8x1xf32>
    %57 = vector.broadcast %55 : vector<8x1xi32> to vector<8x16xi32>
    %58 = arith.cmpi eq, %33, %57 : vector<8x16xi32>
    %cst_27 = arith.constant 0.000000e+00 : f32
    %59 = vector.broadcast %cst_27 : f32 to vector<8x16xf32>
    %60 = arith.select %58, %27, %59 : vector<8x16xi1>, vector<8x16xf32>
    %cst_28 = arith.constant dense<0.000000e+00> : vector<8xf32>
    %61 = vector.multi_reduction <add>, %60, %cst_28 [1] : vector<8x16xf32> to vector<8xf32>
    %62 = vector.shape_cast %61 : vector<8xf32> to vector<8x1xf32>
    %63 = vector.broadcast %55 : vector<8x1xi32> to vector<8x16xi32>
    %64 = arith.cmpi slt, %33, %63 : vector<8x16xi32>
    %cst_29 = arith.constant 0.000000e+00 : f32
    %65 = vector.broadcast %cst_29 : f32 to vector<8x16xf32>
    %66 = arith.select %64, %27, %65 : vector<8x16xi1>, vector<8x16xf32>
    %cst_30 = arith.constant dense<0.000000e+00> : vector<8xf32>
    %67 = vector.multi_reduction <add>, %66, %cst_30 [1] : vector<8x16xf32> to vector<8xf32>
    %68 = vector.shape_cast %67 : vector<8xf32> to vector<8x1xf32>
    %69 = arith.mulf %56, %62 : vector<8x1xf32>
    %70 = arith.addf %69, %68 : vector<8x1xf32>
    %cst_31 = arith.constant 8.000000e+00 : f32
    %71 = vector.broadcast %cst_31 : f32 to vector<8x1xf32>
    %72 = arith.mulf %62, %71 : vector<8x1xf32>
    %73 = math.log %72 : vector<8x1xf32>
    %74 = arith.addf %54, %73 : vector<8x1xf32>
    %75 = tpu.concatenate %50, %70 in 1 : vector<8x1xf32>, vector<8x1xf32> -> vector<8x2xf32>
    %c0_32 = arith.constant 0 : index
    %c0_33 = arith.constant 0 : index
    %76 = vector.load %arg8[%c0_32, %c0_33] : memref<8x2xf32, #tpu.memory_space<vmem>>, vector<8x2xf32>
    tpu.vector_store %arg8[%c0_32, %c0_33], %75 {strides = array<i32>} : memref<8x2xf32, #tpu.memory_space<vmem>>, vector<8x2xf32>,
    %c0_34 = arith.constant 0 : index
    %c0_35 = arith.constant 0 : index
    %77 = vector.load %arg9[%c0_34, %c0_35] : memref<8x1xf32, #tpu.memory_space<vmem>>, vector<8x1xf32>
    tpu.vector_store %arg9[%c0_34, %c0_35], %74 {strides = array<i32>} : memref<8x1xf32, #tpu.memory_space<vmem>>, vector<8x1xf32>,
    return
  }
}

</mosaic_0001>

<llo_original>
// kernel: tpu_custom_call.1
$region0: #{tpu_custom_call.1}
  #allocation0 [shape = 'u32[]', space=smem, size = 0x4, offset = 0x4, fixed_abs, tag = 'smem constant byte address 0x4 - core index']
  #allocation1 [shape = 'u32[144,128]{1,0:T(1,128)}', space=vmem, size = 0x12000, scoped, tag = 'internal scratch']
  %s0 = inlined_call_operand.vmem [shape: f32[8,2], index: 0, kind: input, shape index: {}]
  %s1 = inlined_call_operand.vmem [shape: f32[8,2], index: 1, kind: input, shape index: {}]
  %s2 = inlined_call_operand.vmem [shape: f32[2,32], index: 2, kind: input, shape index: {}]
  %s3 = inlined_call_operand.vmem [shape: f32[1,32], index: 3, kind: input, shape index: {}]
  %s4 = inlined_call_operand.vmem [shape: f32[32,32], index: 4, kind: input, shape index: {}]
  %s5 = inlined_call_operand.vmem [shape: f32[1,32], index: 5, kind: input, shape index: {}]
  %s6 = inlined_call_operand.vmem [shape: f32[32,16], index: 6, kind: input, shape index: {}]
  %s7 = inlined_call_operand.vmem [shape: f32[1,16], index: 7, kind: input, shape index: {}]
  %s8 = inlined_call_operand.vmem [shape: f32[8,2], index: 8, kind: output, shape index: {0}]
  %s9 = inlined_call_operand.vmem [shape: f32[8,1], index: 9, kind: output, shape index: {1}]
  %10 = xla_tuple %s8, %s9
  %s11 = sld [smem:[#allocation0]]
  $region50: #{tpu_custom_call.1} parent=0
    _
  %s13 = ssub.s32 1, %s11
  %s14 = scalar_select 0, %s13, %s11
  // Predicated region
  $region2: #{tpu_custom_call.1} parent=0 // pred_check
    _
  $region3: #{tpu_custom_call.1} parent=0 // pred_check_branch
    %16 = sbr.rel (0) target = $region5
  $region4: #{tpu_custom_call.1} parent=0 // pred_region
    _
  $region5: #{tpu_custom_call.1} parent=0 // pred_fallthru
    _
  // Predicated region
  $region6: #{tpu_custom_call.1} parent=0 // pred_check
    _
  $region7: #{tpu_custom_call.1} parent=0 // pred_check_branch
    %18 = sbr.rel (0) target = $region9
  $region8: #{tpu_custom_call.1} parent=0 // pred_region
    _
  $region9: #{tpu_custom_call.1} parent=0 // pred_fallthru
    _
  // Predicated region
  $region10: #{tpu_custom_call.1} parent=0 // pred_check
    _
  $region11: #{tpu_custom_call.1} parent=0 // pred_check_branch
    %20 = sbr.rel (0) target = $region13
  $region12: #{tpu_custom_call.1} parent=0 // pred_region
    _
  $region13: #{tpu_custom_call.1} parent=0 // pred_fallthru
    _
  // Predicated region
  $region14: #{tpu_custom_call.1} parent=0 // pred_check
    _
  $region15: #{tpu_custom_call.1} parent=0 // pred_check_branch
    %22 = sbr.rel (0) target = $region17
  $region16: #{tpu_custom_call.1} parent=0 // pred_region
    _
  $region17: #{tpu_custom_call.1} parent=0 // pred_fallthru
    _
  // Predicated region
  $region18: #{tpu_custom_call.1} parent=0 // pred_check
    _
  $region19: #{tpu_custom_call.1} parent=0 // pred_check_branch
    %24 = sbr.rel (0) target = $region21
  $region20: #{tpu_custom_call.1} parent=0 // pred_region
    _
  $region21: #{tpu_custom_call.1} parent=0 // pred_fallthru
    _
  // Predicated region
  $region22: #{tpu_custom_call.1} parent=0 // pred_check
    _
  $region23: #{tpu_custom_call.1} parent=0 // pred_check_branch
    %26 = sbr.rel (0) target = $region25
  $region24: #{tpu_custom_call.1} parent=0 // pred_region
    _
  $region25: #{tpu_custom_call.1} parent=0 // pred_fallthru
    _
  // Predicated region
  $region26: #{tpu_custom_call.1} parent=0 // pred_check
    _
  $region27: #{tpu_custom_call.1} parent=0 // pred_check_branch
    %28 = sbr.rel (0) target = $region29
  $region28: #{tpu_custom_call.1} parent=0 // pred_region
    _
  $region29: #{tpu_custom_call.1} parent=0 // pred_fallthru
    _
  // Predicated region
  $region30: #{tpu_custom_call.1} parent=0 // pred_check
    _
  $region31: #{tpu_custom_call.1} parent=0 // pred_check_branch
    %30 = sbr.rel (0) target = $region33
  $region32: #{tpu_custom_call.1} parent=0 // pred_region
    _
  $region33: #{tpu_custom_call.1} parent=0 // pred_fallthru
    _
  %v31 = vld [vmem:[%s0] sm:$0xff]
  %v32 = vld [vmem:[%s1] sm:$0xff]
  %v33 = vld [vmem:[%s2] sm:$0x3]
  %v34 = vld [vmem:[%s3] sm:$0x1]
  %v36 = vlaneseq
  %v37 = vshrl.u32 %v36, 7
  %v38 = vsub.s32 0, %v37
  %v39 = vrot.slane %v34, %v38
  %vm41 = vcmask 15360
  %v43 = vsel %vm41, %v31, 0
  %vm45 = vcmask 1041408
  %v47 = vsel %vm45, %v33, 0
  %49 = vmatprep.subr.mxu0 0.0
  %50 = vmatpush1.msra.mxu0 0.0
  %51 = vmatprep.subr.mxu0 0.0
  %52 = vmatpush1.msra.mxu0 0.0
  %53 = vmatprep.subr.mxu0 0.0
  %54 = vmatpush1.msra.mxu0 0.0
  %55 = vmatprep.subr.mxu0 0.0
  %56 = vmatpush1.msra.mxu0 0.0
  %57 = vmatprep.subr.mxu0 0.0
  %58 = vmatpush1.msra.mxu0 0.0
  %59 = vmatprep.subr.mxu0 0.0
  %60 = vmatpush1.msra.mxu0 0.0
  %61 = vmatprep.subr.mxu0 0.0
  %62 = vmatpush1.msra.mxu0 0.0
  %63 = vmatprep.subr.mxu0 0.0
  %64 = vmatpush1.msra.mxu0 0.0
  %65 = vmatprep.subr.mxu0 0.0
  %66 = vmatpush1.msra.mxu0 0.0
  %67 = vmatprep.subr.mxu0 0.0
  %68 = vmatpush1.msra.mxu0 0.0
  %69 = vmatprep.subr.mxu0 0.0
  %70 = vmatpush1.msra.mxu0 0.0
  %71 = vmatprep.subr.mxu0 0.0
  %72 = vmatpush1.msra.mxu0 0.0
  %73 = vmatprep.subr.mxu0 0.0
  %74 = vmatpush1.msra.mxu0 0.0
  %75 = vmatprep.subr.mxu0 0.0
  %76 = vmatpush1.msra.mxu0 0.0
  %77 = vmatprep.subr.mxu0 0.0
  %78 = vmatpush1.msra.mxu0 0.0
  %79 = vmatprep.subr.mxu0 0.0
  %v80 = vand.u32 %v47, 4294901760
  %81 = vmatpush1.msra.mxu0 %v80
  %82 = vmatprep.subr.mxu0 0.0
  %83 = vmatpush2.msra.mxu0 0.0
  %84 = vmatprep.subr.mxu0 0.0
  %85 = vmatpush2.msra.mxu0 0.0
  %86 = vmatprep.subr.mxu0 0.0
  %87 = vmatpush2.msra.mxu0 0.0
  %88 = vmatprep.subr.mxu0 0.0
  %89 = vmatpush2.msra.mxu0 0.0
  %90 = vmatprep.subr.mxu0 0.0
  %91 = vmatpush2.msra.mxu0 0.0
  %92 = vmatprep.subr.mxu0 0.0
  %93 = vmatpush2.msra.mxu0 0.0
  %94 = vmatprep.subr.mxu0 0.0
  %95 = vmatpush2.msra.mxu0 0.0
  %96 = vmatprep.subr.mxu0 0.0
  %97 = vmatpush2.msra.mxu0 0.0
  %98 = vmatprep.subr.mxu0 0.0
  %99 = vmatpush2.msra.mxu0 0.0
  %100 = vmatprep.subr.mxu0 0.0
  %101 = vmatpush2.msra.mxu0 0.0
  %102 = vmatprep.subr.mxu0 0.0
  %103 = vmatpush2.msra.mxu0 0.0
  %104 = vmatprep.subr.mxu0 0.0
  %105 = vmatpush2.msra.mxu0 0.0
  %106 = vmatprep.subr.mxu0 0.0
  %107 = vmatpush2.msra.mxu0 0.0
  %108 = vmatprep.subr.mxu0 0.0
  %109 = vmatpush2.msra.mxu0 0.0
  %110 = vmatprep.subr.mxu0 0.0
  %111 = vmatpush2.msra.mxu0 0.0
  %112 = vmatprep.subr.mxu0 0.0
  %113 = vmatpush2.msra.mxu0 0.0
  %114 = vmatprep.mubr.f32.mxu0 0.0
  %v115 = vand.u32 %v43, 4294901760
  %v116 = vsub.f32 %v43, %v115
  %v117 = vand.u32 %v116, 4294901760
  %v118 = vsub.f32 %v116, %v117
  %v119 = vand.u32 %v118, 4294901760
  %120 = vmatmul.mubr.f32.gmra.mxu0 %v119
  %v121 = vpop.f32.mrf.mxu0
  %v122 = vadd.f32 %v39, %v121
  %v123 = vpop.f32.mrf.mxu0
  %124 = vdwg.mxu0
  %125 = vmatprep.subr.mxu0 0.0
  %126 = vmatpush1.msra.mxu0 0.0
  %127 = vmatprep.subr.mxu0 0.0
  %128 = vmatpush1.msra.mxu0 0.0
  %129 = vmatprep.subr.mxu0 0.0
  %130 = vmatpush1.msra.mxu0 0.0
  %131 = vmatprep.subr.mxu0 0.0
  %132 = vmatpush1.msra.mxu0 0.0
  %133 = vmatprep.subr.mxu0 0.0
  %134 = vmatpush1.msra.mxu0 0.0
  %135 = vmatprep.subr.mxu0 0.0
  %136 = vmatpush1.msra.mxu0 0.0
  %137 = vmatprep.subr.mxu0 0.0
  %138 = vmatpush1.msra.mxu0 0.0
  %139 = vmatprep.subr.mxu0 0.0
  %140 = vmatpush1.msra.mxu0 0.0
  %141 = vmatprep.subr.mxu0 0.0
  %142 = vmatpush1.msra.mxu0 0.0
  %143 = vmatprep.subr.mxu0 0.0
  %144 = vmatpush1.msra.mxu0 0.0
  %145 = vmatprep.subr.mxu0 0.0
  %146 = vmatpush1.msra.mxu0 0.0
  %147 = vmatprep.subr.mxu0 0.0
  %148 = vmatpush1.msra.mxu0 0.0
  %149 = vmatprep.subr.mxu0 0.0
  %150 = vmatpush1.msra.mxu0 0.0
  %151 = vmatprep.subr.mxu0 0.0
  %152 = vmatpush1.msra.mxu0 0.0
  %153 = vmatprep.subr.mxu0 0.0
  %154 = vmatpush1.msra.mxu0 0.0
  %155 = vmatprep.subr.mxu0 0.0
  %v156 = vand.u32 %v47, 4294901760
  %v157 = vsub.f32 %v47, %v156
  %v158 = vand.u32 %v157, 4294901760
  %v159 = vsub.f32 %v157, %v158
  %v160 = vand.u32 %v159, 4294901760
  %161 = vmatpush1.msra.mxu0 %v160
  %162 = vmatprep.subr.mxu0 0.0
  %163 = vmatpush2.msra.mxu0 0.0
  %164 = vmatprep.subr.mxu0 0.0
  %165 = vmatpush2.msra.mxu0 0.0
  %166 = vmatprep.subr.mxu0 0.0
  %167 = vmatpush2.msra.mxu0 0.0
  %168 = vmatprep.subr.mxu0 0.0
  %169 = vmatpush2.msra.mxu0 0.0
  %170 = vmatprep.subr.mxu0 0.0
  %171 = vmatpush2.msra.mxu0 0.0
  %172 = vmatprep.subr.mxu0 0.0
  %173 = vmatpush2.msra.mxu0 0.0
  %174 = vmatprep.subr.mxu0 0.0
  %175 = vmatpush2.msra.mxu0 0.0
  %176 = vmatprep.subr.mxu0 0.0
  %177 = vmatpush2.msra.mxu0 0.0
  %178 = vmatprep.subr.mxu0 0.0
  %179 = vmatpush2.msra.mxu0 0.0
  %180 = vmatprep.subr.mxu0 0.0
  %181 = vmatpush2.msra.mxu0 0.0
  %182 = vmatprep.subr.mxu0 0.0
  %183 = vmatpush2.msra.mxu0 0.0
  %184 = vmatprep.subr.mxu0 0.0
  %185 = vmatpush2.msra.mxu0 0.0
  %186 = vmatprep.subr.mxu0 0.0
  %187 = vmatpush2.msra.mxu0 0.0
  %188 = vmatprep.subr.mxu0 0.0
  %189 = vmatpush2.msra.mxu0 0.0
  %190 = vmatprep.subr.mxu0 0.0
  %191 = vmatpush2.msra.mxu0 0.0
  %192 = vmatprep.subr.mxu0 0.0
  %193 = vmatpush2.msra.mxu0 0.0
  %194 = vmatprep.mubr.f32.mxu0 0.0
  %v195 = vand.u32 %v43, 4294901760
  %196 = vmatmul.mubr.f32.gmra.mxu0 %v195
  %v197 = vpop.f32.mrf.mxu0
  %v198 = vadd.f32 %v122, %v197
  %v199 = vpop.f32.mrf.mxu0
  %200 = vdwg.mxu0
  %201 = vmatprep.subr.mxu0 0.0
  %202 = vmatpush1.msra.mxu0 0.0
  %203 = vmatprep.subr.mxu0 0.0
  %204 = vmatpush1.msra.mxu0 0.0
  %205 = vmatprep.subr.mxu0 0.0
  %206 = vmatpush1.msra.mxu0 0.0
  %207 = vmatprep.subr.mxu0 0.0
  %208 = vmatpush1.msra.mxu0 0.0
  %209 = vmatprep.subr.mxu0 0.0
  %210 = vmatpush1.msra.mxu0 0.0
  %211 = vmatprep.subr.mxu0 0.0
  %212 = vmatpush1.msra.mxu0 0.0
  %213 = vmatprep.subr.mxu0 0.0
  %214 = vmatpush1.msra.mxu0 0.0
  %215 = vmatprep.subr.mxu0 0.0
  %216 = vmatpush1.msra.mxu0 0.0
  %217 = vmatprep.subr.mxu0 0.0
  %218 = vmatpush1.msra.mxu0 0.0
  %219 = vmatprep.subr.mxu0 0.0
  %220 = vmatpush1.msra.mxu0 0.0
  %221 = vmatprep.subr.mxu0 0.0
  %222 = vmatpush1.msra.mxu0 0.0
  %223 = vmatprep.subr.mxu0 0.0
  %224 = vmatpush1.msra.mxu0 0.0
  %225 = vmatprep.subr.mxu0 0.0
  %226 = vmatpush1.msra.mxu0 0.0
  %227 = vmatprep.subr.mxu0 0.0
  %228 = vmatpush1.msra.mxu0 0.0
  %229 = vmatprep.subr.mxu0 0.0
  %230 = vmatpush1.msra.mxu0 0.0
  %231 = vmatprep.subr.mxu0 0.0
  %v232 = vand.u32 %v47, 4294901760
  %v233 = vsub.f32 %v47, %v232
  %234 = vmatpush1.msra.mxu0 %v233
  %235 = vmatprep.subr.mxu0 0.0
  %236 = vmatpush2.msra.mxu0 0.0
  %237 = vmatprep.subr.mxu0 0.0
  %238 = vmatpush2.msra.mxu0 0.0
  %239 = vmatprep.subr.mxu0 0.0
  %240 = vmatpush2.msra.mxu0 0.0
  %241 = vmatprep.subr.mxu0 0.0
  %242 = vmatpush2.msra.mxu0 0.0
  %243 = vmatprep.subr.mxu0 0.0
  %244 = vmatpush2.msra.mxu0 0.0
  %245 = vmatprep.subr.mxu0 0.0
  %246 = vmatpush2.msra.mxu0 0.0
  %247 = vmatprep.subr.mxu0 0.0
  %248 = vmatpush2.msra.mxu0 0.0
  %249 = vmatprep.subr.mxu0 0.0
  %250 = vmatpush2.msra.mxu0 0.0
  %251 = vmatprep.subr.mxu0 0.0
  %252 = vmatpush2.msra.mxu0 0.0
  %253 = vmatprep.subr.mxu0 0.0
  %254 = vmatpush2.msra.mxu0 0.0
  %255 = vmatprep.subr.mxu0 0.0
  %256 = vmatpush2.msra.mxu0 0.0
  %257 = vmatprep.subr.mxu0 0.0
  %258 = vmatpush2.msra.mxu0 0.0
  %259 = vmatprep.subr.mxu0 0.0
  %260 = vmatpush2.msra.mxu0 0.0
  %261 = vmatprep.subr.mxu0 0.0
  %262 = vmatpush2.msra.mxu0 0.0
  %263 = vmatprep.subr.mxu0 0.0
  %264 = vmatpush2.msra.mxu0 0.0
  %265 = vmatprep.subr.mxu0 0.0
  %266 = vmatpush2.msra.mxu0 0.0
  %267 = vmatprep.mubr.f32.mxu0 0.0
  %v268 = vand.u32 %v43, 4294901760
  %v269 = vsub.f32 %v43, %v268
  %270 = vmatmul.mubr.f32.gmra.mxu0 %v269
  %v271 = vpop.f32.mrf.mxu0
  %v272 = vadd.f32 %v198, %v271
  %v273 = vpop.f32.mrf.mxu0
  %274 = vdwg.mxu0
  %275 = vmatprep.subr.mxu0 0.0
  %276 = vmatpush1.msra.mxu0 0.0
  %277 = vmatprep.subr.mxu0 0.0
  %278 = vmatpush1.msra.mxu0 0.0
  %279 = vmatprep.subr.mxu0 0.0
  %280 = vmatpush1.msra.mxu0 0.0
  %281 = vmatprep.subr.mxu0 0.0
  %282 = vmatpush1.msra.mxu0 0.0
  %283 = vmatprep.subr.mxu0 0.0
  %284 = vmatpush1.msra.mxu0 0.0
  %285 = vmatprep.subr.mxu0 0.0
  %286 = vmatpush1.msra.mxu0 0.0
  %287 = vmatprep.subr.mxu0 0.0
  %288 = vmatpush1.msra.mxu0 0.0
  %289 = vmatprep.subr.mxu0 0.0
  %290 = vmatpush1.msra.mxu0 0.0
  %291 = vmatprep.subr.mxu0 0.0
  %292 = vmatpush1.msra.mxu0 0.0
  %293 = vmatprep.subr.mxu0 0.0
  %294 = vmatpush1.msra.mxu0 0.0
  %295 = vmatprep.subr.mxu0 0.0
  %296 = vmatpush1.msra.mxu0 0.0
  %297 = vmatprep.subr.mxu0 0.0
  %298 = vmatpush1.msra.mxu0 0.0
  %299 = vmatprep.subr.mxu0 0.0
  %300 = vmatpush1.msra.mxu0 0.0
  %301 = vmatprep.subr.mxu0 0.0
  %302 = vmatpush1.msra.mxu0 0.0
  %303 = vmatprep.subr.mxu0 0.0
  %304 = vmatpush1.msra.mxu0 0.0
  %305 = vmatprep.subr.mxu0 0.0
  %v306 = vand.u32 %v47, 4294901760
  %307 = vmatpush1.msra.mxu0 %v306
  %308 = vmatprep.subr.mxu0 0.0
  %309 = vmatpush2.msra.mxu0 0.0
  %310 = vmatprep.subr.mxu0 0.0
  %311 = vmatpush2.msra.mxu0 0.0
  %312 = vmatprep.subr.mxu0 0.0
  %313 = vmatpush2.msra.mxu0 0.0
  %314 = vmatprep.subr.mxu0 0.0
  %315 = vmatpush2.msra.mxu0 0.0
  %316 = vmatprep.subr.mxu0 0.0
  %317 = vmatpush2.msra.mxu0 0.0
  %318 = vmatprep.subr.mxu0 0.0
  %319 = vmatpush2.msra.mxu0 0.0
  %320 = vmatprep.subr.mxu0 0.0
  %321 = vmatpush2.msra.mxu0 0.0
  %322 = vmatprep.subr.mxu0 0.0
  %323 = vmatpush2.msra.mxu0 0.0
  %324 = vmatprep.subr.mxu0 0.0
  %325 = vmatpush2.msra.mxu0 0.0
  %326 = vmatprep.subr.mxu0 0.0
  %327 = vmatpush2.msra.mxu0 0.0
  %328 = vmatprep.subr.mxu0 0.0
  %329 = vmatpush2.msra.mxu0 0.0
  %330 = vmatprep.subr.mxu0 0.0
  %331 = vmatpush2.msra.mxu0 0.0
  %332 = vmatprep.subr.mxu0 0.0
  %333 = vmatpush2.msra.mxu0 0.0
  %334 = vmatprep.subr.mxu0 0.0
  %335 = vmatpush2.msra.mxu0 0.0
  %336 = vmatprep.subr.mxu0 0.0
  %337 = vmatpush2.msra.mxu0 0.0
  %338 = vmatprep.subr.mxu0 0.0
  %339 = vmatpush2.msra.mxu0 0.0
  %340 = vmatprep.mubr.f32.mxu0 0.0
  %v341 = vand.u32 %v43, 4294901760
  %v342 = vsub.f32 %v43, %v341
  %v343 = vand.u32 %v342, 4294901760
  %344 = vmatmul.mubr.f32.gmra.mxu0 %v343
  %v345 = vpop.f32.mrf.mxu0
  %v346 = vadd.f32 %v272, %v345
  %v347 = vpop.f32.mrf.mxu0
  %348 = vdwg.mxu0
  %349 = vmatprep.subr.mxu0 0.0
  %350 = vmatpush1.msra.mxu0 0.0
  %351 = vmatprep.subr.mxu0 0.0
  %352 = vmatpush1.msra.mxu0 0.0
  %353 = vmatprep.subr.mxu0 0.0
  %354 = vmatpush1.msra.mxu0 0.0
  %355 = vmatprep.subr.mxu0 0.0
  %356 = vmatpush1.msra.mxu0 0.0
  %357 = vmatprep.subr.mxu0 0.0
  %358 = vmatpush1.msra.mxu0 0.0
  %359 = vmatprep.subr.mxu0 0.0
  %360 = vmatpush1.msra.mxu0 0.0
  %361 = vmatprep.subr.mxu0 0.0
  %362 = vmatpush1.msra.mxu0 0.0
  %363 = vmatprep.subr.mxu0 0.0
  %364 = vmatpush1.msra.mxu0 0.0
  %365 = vmatprep.subr.mxu0 0.0
  %366 = vmatpush1.msra.mxu0 0.0
  %367 = vmatprep.subr.mxu0 0.0
  %368 = vmatpush1.msra.mxu0 0.0
  %369 = vmatprep.subr.mxu0 0.0
  %370 = vmatpush1.msra.mxu0 0.0
  %371 = vmatprep.subr.mxu0 0.0
  %372 = vmatpush1.msra.mxu0 0.0
  %373 = vmatprep.subr.mxu0 0.0
  %374 = vmatpush1.msra.mxu0 0.0
  %375 = vmatprep.subr.mxu0 0.0
  %376 = vmatpush1.msra.mxu0 0.0
  %377 = vmatprep.subr.mxu0 0.0
  %378 = vmatpush1.msra.mxu0 0.0
  %379 = vmatprep.subr.mxu0 0.0
  %v380 = vand.u32 %v47, 4294901760
  %v381 = vsub.f32 %v47, %v380
  %v382 = vand.u32 %v381, 4294901760
  %383 = vmatpush1.msra.mxu0 %v382
  %384 = vmatprep.subr.mxu0 0.0
  %385 = vmatpush2.msra.mxu0 0.0
  %386 = vmatprep.subr.mxu0 0.0
  %387 = vmatpush2.msra.mxu0 0.0
  %388 = vmatprep.subr.mxu0 0.0
  %389 = vmatpush2.msra.mxu0 0.0
  %390 = vmatprep.subr.mxu0 0.0
  %391 = vmatpush2.msra.mxu0 0.0
  %392 = vmatprep.subr.mxu0 0.0
  %393 = vmatpush2.msra.mxu0 0.0
  %394 = vmatprep.subr.mxu0 0.0
  %395 = vmatpush2.msra.mxu0 0.0
  %396 = vmatprep.subr.mxu0 0.0
  %397 = vmatpush2.msra.mxu0 0.0
  %398 = vmatprep.subr.mxu0 0.0
  %399 = vmatpush2.msra.mxu0 0.0
  %400 = vmatprep.subr.mxu0 0.0
  %401 = vmatpush2.msra.mxu0 0.0
  %402 = vmatprep.subr.mxu0 0.0
  %403 = vmatpush2.msra.mxu0 0.0
  %404 = vmatprep.subr.mxu0 0.0
  %405 = vmatpush2.msra.mxu0 0.0
  %406 = vmatprep.subr.mxu0 0.0
  %407 = vmatpush2.msra.mxu0 0.0
  %408 = vmatprep.subr.mxu0 0.0
  %409 = vmatpush2.msra.mxu0 0.0
  %410 = vmatprep.subr.mxu0 0.0
  %411 = vmatpush2.msra.mxu0 0.0
  %412 = vmatprep.subr.mxu0 0.0
  %413 = vmatpush2.msra.mxu0 0.0
  %414 = vmatprep.subr.mxu0 0.0
  %415 = vmatpush2.msra.mxu0 0.0
  %416 = vmatprep.mubr.f32.mxu0 0.0
  %v417 = vand.u32 %v43, 4294901760
  %418 = vmatmul.mubr.f32.gmra.mxu0 %v417
  %v419 = vpop.f32.mrf.mxu0
  %v420 = vadd.f32 %v346, %v419
  %v421 = vpop.f32.mrf.mxu0
  %422 = vdwg.mxu0
  %423 = vmatprep.subr.mxu0 0.0
  %424 = vmatpush1.msra.mxu0 0.0
  %425 = vmatprep.subr.mxu0 0.0
  %426 = vmatpush1.msra.mxu0 0.0
  %427 = vmatprep.subr.mxu0 0.0
  %428 = vmatpush1.msra.mxu0 0.0
  %429 = vmatprep.subr.mxu0 0.0
  %430 = vmatpush1.msra.mxu0 0.0
  %431 = vmatprep.subr.mxu0 0.0
  %432 = vmatpush1.msra.mxu0 0.0
  %433 = vmatprep.subr.mxu0 0.0
  %434 = vmatpush1.msra.mxu0 0.0
  %435 = vmatprep.subr.mxu0 0.0
  %436 = vmatpush1.msra.mxu0 0.0
  %437 = vmatprep.subr.mxu0 0.0
  %438 = vmatpush1.msra.mxu0 0.0
  %439 = vmatprep.subr.mxu0 0.0
  %440 = vmatpush1.msra.mxu0 0.0
  %441 = vmatprep.subr.mxu0 0.0
  %442 = vmatpush1.msra.mxu0 0.0
  %443 = vmatprep.subr.mxu0 0.0
  %444 = vmatpush1.msra.mxu0 0.0
  %445 = vmatprep.subr.mxu0 0.0
  %446 = vmatpush1.msra.mxu0 0.0
  %447 = vmatprep.subr.mxu0 0.0
  %448 = vmatpush1.msra.mxu0 0.0
  %449 = vmatprep.subr.mxu0 0.0
  %450 = vmatpush1.msra.mxu0 0.0
  %451 = vmatprep.subr.mxu0 0.0
  %452 = vmatpush1.msra.mxu0 0.0
  %453 = vmatprep.subr.mxu0 0.0
  %v454 = vand.u32 %v47, 4294901760
  %455 = vmatpush1.msra.mxu0 %v454
  %456 = vmatprep.subr.mxu0 0.0
  %457 = vmatpush2.msra.mxu0 0.0
  %458 = vmatprep.subr.mxu0 0.0
  %459 = vmatpush2.msra.mxu0 0.0
  %460 = vmatprep.subr.mxu0 0.0
  %461 = vmatpush2.msra.mxu0 0.0
  %462 = vmatprep.subr.mxu0 0.0
  %463 = vmatpush2.msra.mxu0 0.0
  %464 = vmatprep.subr.mxu0 0.0
  %465 = vmatpush2.msra.mxu0 0.0
  %466 = vmatprep.subr.mxu0 0.0
  %467 = vmatpush2.msra.mxu0 0.0
  %468 = vmatprep.subr.mxu0 0.0
  %469 = vmatpush2.msra.mxu0 0.0
  %470 = vmatprep.subr.mxu0 0.0
  %471 = vmatpush2.msra.mxu0 0.0
  %472 = vmatprep.subr.mxu0 0.0
  %473 = vmatpush2.msra.mxu0 0.0
  %474 = vmatprep.subr.mxu0 0.0
  %475 = vmatpush2.msra.mxu0 0.0
  %476 = vmatprep.subr.mxu0 0.0
  %477 = vmatpush2.msra.mxu0 0.0
  %478 = vmatprep.subr.mxu0 0.0
  %479 = vmatpush2.msra.mxu0 0.0
  %480 = vmatprep.subr.mxu0 0.0
  %481 = vmatpush2.msra.mxu0 0.0
  %482 = vmatprep.subr.mxu0 0.0
  %483 = vmatpush2.msra.mxu0 0.0
  %484 = vmatprep.subr.mxu0 0.0
  %485 = vmatpush2.msra.mxu0 0.0
  %486 = vmatprep.subr.mxu0 0.0
  %487 = vmatpush2.msra.mxu0 0.0
  %488 = vmatprep.mubr.f32.mxu0 0.0
  %v489 = vand.u32 %v43, 4294901760
  %490 = vmatmul.mubr.f32.gmra.mxu0 %v489
  %v491 = vpop.f32.mrf.mxu0
  %v492 = vadd.f32 %v420, %v491
  %v493 = vpop.f32.mrf.mxu0
  %494 = vdwg.mxu0
  %v495 = vld [vmem:[%s4] sm:$0xff]
  %v496 = vld [vmem:[%s4 + $0x8] sm:$0xff]
  %v497 = vld [vmem:[%s4 + $0x10] sm:$0xff]
  %v498 = vld [vmem:[%s4 + $0x18] sm:$0xff]
  %v499 = vld [vmem:[%s5] sm:$0x1]
  %v501 = vlaneseq
  %v502 = vshrl.u32 %v501, 7
  %v503 = vsub.s32 0, %v502
  %v504 = vrot.slane %v499, %v503
  %vm506 = vcmask 261120
  %v508 = vsel %vm506, %v492, 0
  %510 = vmatprep.subr.mxu0 0.0
  %511 = vmatpush1.msra.mxu0 0.0
  %512 = vmatprep.subr.mxu0 0.0
  %513 = vmatpush1.msra.mxu0 0.0
  %514 = vmatprep.subr.mxu0 0.0
  %515 = vmatpush1.msra.mxu0 0.0
  %516 = vmatprep.subr.mxu0 0.0
  %517 = vmatpush1.msra.mxu0 0.0
  %518 = vmatprep.subr.mxu0 0.0
  %519 = vmatpush1.msra.mxu0 0.0
  %520 = vmatprep.subr.mxu0 0.0
  %521 = vmatpush1.msra.mxu0 0.0
  %522 = vmatprep.subr.mxu0 0.0
  %523 = vmatpush1.msra.mxu0 0.0
  %524 = vmatprep.subr.mxu0 0.0
  %525 = vmatpush1.msra.mxu0 0.0
  %526 = vmatprep.subr.mxu0 0.0
  %527 = vmatpush1.msra.mxu0 0.0
  %528 = vmatprep.subr.mxu0 0.0
  %529 = vmatpush1.msra.mxu0 0.0
  %530 = vmatprep.subr.mxu0 0.0
  %531 = vmatpush1.msra.mxu0 0.0
  %532 = vmatprep.subr.mxu0 0.0
  %533 = vmatpush1.msra.mxu0 0.0
  %534 = vmatprep.subr.mxu0 0.0
  %v535 = vand.u32 %v498, 4294901760
  %536 = vmatpush1.msra.mxu0 %v535
  %537 = vmatprep.subr.mxu0 0.0
  %v538 = vand.u32 %v497, 4294901760
  %539 = vmatpush1.msra.mxu0 %v538
  %540 = vmatprep.subr.mxu0 0.0
  %v541 = vand.u32 %v496, 4294901760
  %542 = vmatpush1.msra.mxu0 %v541
  %543 = vmatprep.subr.mxu0 0.0
  %v544 = vand.u32 %v495, 4294901760
  %545 = vmatpush1.msra.mxu0 %v544
  %546 = vmatprep.subr.mxu0 0.0
  %547 = vmatpush2.msra.mxu0 0.0
  %548 = vmatprep.subr.mxu0 0.0
  %549 = vmatpush2.msra.mxu0 0.0
  %550 = vmatprep.subr.mxu0 0.0
  %551 = vmatpush2.msra.mxu0 0.0
  %552 = vmatprep.subr.mxu0 0.0
  %553 = vmatpush2.msra.mxu0 0.0
  %554 = vmatprep.subr.mxu0 0.0
  %555 = vmatpush2.msra.mxu0 0.0
  %556 = vmatprep.subr.mxu0 0.0
  %557 = vmatpush2.msra.mxu0 0.0
  %558 = vmatprep.subr.mxu0 0.0
  %559 = vmatpush2.msra.mxu0 0.0
  %560 = vmatprep.subr.mxu0 0.0
  %561 = vmatpush2.msra.mxu0 0.0
  %562 = vmatprep.subr.mxu0 0.0
  %563 = vmatpush2.msra.mxu0 0.0
  %564 = vmatprep.subr.mxu0 0.0
  %565 = vmatpush2.msra.mxu0 0.0
  %566 = vmatprep.subr.mxu0 0.0
  %567 = vmatpush2.msra.mxu0 0.0
  %568 = vmatprep.subr.mxu0 0.0
  %569 = vmatpush2.msra.mxu0 0.0
  %570 = vmatprep.subr.mxu0 0.0
  %571 = vmatpush2.msra.mxu0 0.0
  %572 = vmatprep.subr.mxu0 0.0
  %573 = vmatpush2.msra.mxu0 0.0
  %574 = vmatprep.subr.mxu0 0.0
  %575 = vmatpush2.msra.mxu0 0.0
  %576 = vmatprep.subr.mxu0 0.0
  %577 = vmatpush2.msra.mxu0 0.0
  %578 = vmatprep.mubr.f32.mxu0 0.0
  %v579 = vand.u32 %v508, 4294901760
  %v580 = vsub.f32 %v508, %v579
  %v581 = vand.u32 %v580, 4294901760
  %v582 = vsub.f32 %v580, %v581
  %v583 = vand.u32 %v582, 4294901760
  %584 = vmatmul.mubr.f32.gmra.mxu0 %v583
  %v585 = vpop.f32.mrf.mxu0
  %v586 = vadd.f32 %v504, %v585
  %v587 = vpop.f32.mrf.mxu0
  %588 = vdwg.mxu0
  %589 = vmatprep.subr.mxu0 0.0
  %590 = vmatpush1.msra.mxu0 0.0
  %591 = vmatprep.subr.mxu0 0.0
  %592 = vmatpush1.msra.mxu0 0.0
  %593 = vmatprep.subr.mxu0 0.0
  %594 = vmatpush1.msra.mxu0 0.0
  %595 = vmatprep.subr.mxu0 0.0
  %596 = vmatpush1.msra.mxu0 0.0
  %597 = vmatprep.subr.mxu0 0.0
  %598 = vmatpush1.msra.mxu0 0.0
  %599 = vmatprep.subr.mxu0 0.0
  %600 = vmatpush1.msra.mxu0 0.0
  %601 = vmatprep.subr.mxu0 0.0
  %602 = vmatpush1.msra.mxu0 0.0
  %603 = vmatprep.subr.mxu0 0.0
  %604 = vmatpush1.msra.mxu0 0.0
  %605 = vmatprep.subr.mxu0 0.0
  %606 = vmatpush1.msra.mxu0 0.0
  %607 = vmatprep.subr.mxu0 0.0
  %608 = vmatpush1.msra.mxu0 0.0
  %609 = vmatprep.subr.mxu0 0.0
  %610 = vmatpush1.msra.mxu0 0.0
  %611 = vmatprep.subr.mxu0 0.0
  %612 = vmatpush1.msra.mxu0 0.0
  %613 = vmatprep.subr.mxu0 0.0
  %v614 = vand.u32 %v498, 4294901760
  %v615 = vsub.f32 %v498, %v614
  %v616 = vand.u32 %v615, 4294901760
  %v617 = vsub.f32 %v615, %v616
  %v618 = vand.u32 %v617, 4294901760
  %619 = vmatpush1.msra.mxu0 %v618
  %620 = vmatprep.subr.mxu0 0.0
  %v621 = vand.u32 %v497, 4294901760
  %v622 = vsub.f32 %v497, %v621
  %v623 = vand.u32 %v622, 4294901760
  %v624 = vsub.f32 %v622, %v623
  %v625 = vand.u32 %v624, 4294901760
  %626 = vmatpush1.msra.mxu0 %v625
  %627 = vmatprep.subr.mxu0 0.0
  %v628 = vand.u32 %v496, 4294901760
  %v629 = vsub.f32 %v496, %v628
  %v630 = vand.u32 %v629, 4294901760
  %v631 = vsub.f32 %v629, %v630
  %v632 = vand.u32 %v631, 4294901760
  %633 = vmatpush1.msra.mxu0 %v632
  %634 = vmatprep.subr.mxu0 0.0
  %v635 = vand.u32 %v495, 4294901760
  %v636 = vsub.f32 %v495, %v635
  %v637 = vand.u32 %v636, 4294901760
  %v638 = vsub.f32 %v636, %v637
  %v639 = vand.u32 %v638, 4294901760
  %640 = vmatpush1.msra.mxu0 %v639
  %641 = vmatprep.subr.mxu0 0.0
  %642 = vmatpush2.msra.mxu0 0.0
  %643 = vmatprep.subr.mxu0 0.0
  %644 = vmatpush2.msra.mxu0 0.0
  %645 = vmatprep.subr.mxu0 0.0
  %646 = vmatpush2.msra.mxu0 0.0
  %647 = vmatprep.subr.mxu0 0.0
  %648 = vmatpush2.msra.mxu0 0.0
  %649 = vmatprep.subr.mxu0 0.0
  %650 = vmatpush2.msra.mxu0 0.0
  %651 = vmatprep.subr.mxu0 0.0
  %652 = vmatpush2.msra.mxu0 0.0
  %653 = vmatprep.subr.mxu0 0.0
  %654 = vmatpush2.msra.mxu0 0.0
  %655 = vmatprep.subr.mxu0 0.0
  %656 = vmatpush2.msra.mxu0 0.0
  %657 = vmatprep.subr.mxu0 0.0
  %658 = vmatpush2.msra.mxu0 0.0
  %659 = vmatprep.subr.mxu0 0.0
  %660 = vmatpush2.msra.mxu0 0.0
  %661 = vmatprep.subr.mxu0 0.0
  %662 = vmatpush2.msra.mxu0 0.0
  %663 = vmatprep.subr.mxu0 0.0
  %664 = vmatpush2.msra.mxu0 0.0
  %665 = vmatprep.subr.mxu0 0.0
  %666 = vmatpush2.msra.mxu0 0.0
  %667 = vmatprep.subr.mxu0 0.0
  %668 = vmatpush2.msra.mxu0 0.0
  %669 = vmatprep.subr.mxu0 0.0
  %670 = vmatpush2.msra.mxu0 0.0
  %671 = vmatprep.subr.mxu0 0.0
  %672 = vmatpush2.msra.mxu0 0.0
  %673 = vmatprep.mubr.f32.mxu0 0.0
  %v674 = vand.u32 %v508, 4294901760
  %675 = vmatmul.mubr.f32.gmra.mxu0 %v674
  %v676 = vpop.f32.mrf.mxu0
  %v677 = vadd.f32 %v586, %v676
  %v678 = vpop.f32.mrf.mxu0
  %679 = vdwg.mxu0
  %680 = vmatprep.subr.mxu0 0.0
  %681 = vmatpush1.msra.mxu0 0.0
  %682 = vmatprep.subr.mxu0 0.0
  %683 = vmatpush1.msra.mxu0 0.0
  %684 = vmatprep.subr.mxu0 0.0
  %685 = vmatpush1.msra.mxu0 0.0
  %686 = vmatprep.subr.mxu0 0.0
  %687 = vmatpush1.msra.mxu0 0.0
  %688 = vmatprep.subr.mxu0 0.0
  %689 = vmatpush1.msra.mxu0 0.0
  %690 = vmatprep.subr.mxu0 0.0
  %691 = vmatpush1.msra.mxu0 0.0
  %692 = vmatprep.subr.mxu0 0.0
  %693 = vmatpush1.msra.mxu0 0.0
  %694 = vmatprep.subr.mxu0 0.0
  %695 = vmatpush1.msra.mxu0 0.0
  %696 = vmatprep.subr.mxu0 0.0
  %697 = vmatpush1.msra.mxu0 0.0
  %698 = vmatprep.subr.mxu0 0.0
  %699 = vmatpush1.msra.mxu0 0.0
  %700 = vmatprep.subr.mxu0 0.0
  %701 = vmatpush1.msra.mxu0 0.0
  %702 = vmatprep.subr.mxu0 0.0
  %703 = vmatpush1.msra.mxu0 0.0
  %704 = vmatprep.subr.mxu0 0.0
  %v705 = vand.u32 %v498, 4294901760
  %v706 = vsub.f32 %v498, %v705
  %707 = vmatpush1.msra.mxu0 %v706
  %708 = vmatprep.subr.mxu0 0.0
  %v709 = vand.u32 %v497, 4294901760
  %v710 = vsub.f32 %v497, %v709
  %711 = vmatpush1.msra.mxu0 %v710
  %712 = vmatprep.subr.mxu0 0.0
  %v713 = vand.u32 %v496, 4294901760
  %v714 = vsub.f32 %v496, %v713
  %715 = vmatpush1.msra.mxu0 %v714
  %716 = vmatprep.subr.mxu0 0.0
  %v717 = vand.u32 %v495, 4294901760
  %v718 = vsub.f32 %v495, %v717
  %719 = vmatpush1.msra.mxu0 %v718
  %720 = vmatprep.subr.mxu0 0.0
  %721 = vmatpush2.msra.mxu0 0.0
  %722 = vmatprep.subr.mxu0 0.0
  %723 = vmatpush2.msra.mxu0 0.0
  %724 = vmatprep.subr.mxu0 0.0
  %725 = vmatpush2.msra.mxu0 0.0
  %726 = vmatprep.subr.mxu0 0.0
  %727 = vmatpush2.msra.mxu0 0.0
  %728 = vmatprep.subr.mxu0 0.0
  %729 = vmatpush2.msra.mxu0 0.0
  %730 = vmatprep.subr.mxu0 0.0
  %731 = vmatpush2.msra.mxu0 0.0
  %732 = vmatprep.subr.mxu0 0.0
  %733 = vmatpush2.msra.mxu0 0.0
  %734 = vmatprep.subr.mxu0 0.0
  %735 = vmatpush2.msra.mxu0 0.0
  %736 = vmatprep.subr.mxu0 0.0
  %737 = vmatpush2.msra.mxu0 0.0
  %738 = vmatprep.subr.mxu0 0.0
  %739 = vmatpush2.msra.mxu0 0.0
  %740 = vmatprep.subr.mxu0 0.0
  %741 = vmatpush2.msra.mxu0 0.0
  %742 = vmatprep.subr.mxu0 0.0
  %743 = vmatpush2.msra.mxu0 0.0
  %744 = vmatprep.subr.mxu0 0.0
  %745 = vmatpush2.msra.mxu0 0.0
  %746 = vmatprep.subr.mxu0 0.0
  %747 = vmatpush2.msra.mxu0 0.0
  %748 = vmatprep.subr.mxu0 0.0
  %749 = vmatpush2.msra.mxu0 0.0
  %750 = vmatprep.subr.mxu0 0.0
  %751 = vmatpush2.msra.mxu0 0.0
  %752 = vmatprep.mubr.f32.mxu0 0.0
  %v753 = vand.u32 %v508, 4294901760
  %v754 = vsub.f32 %v508, %v753
  %755 = vmatmul.mubr.f32.gmra.mxu0 %v754
  %v756 = vpop.f32.mrf.mxu0
  %v757 = vadd.f32 %v677, %v756
  %v758 = vpop.f32.mrf.mxu0
  %759 = vdwg.mxu0
  %760 = vmatprep.subr.mxu0 0.0
  %761 = vmatpush1.msra.mxu0 0.0
  %762 = vmatprep.subr.mxu0 0.0
  %763 = vmatpush1.msra.mxu0 0.0
  %764 = vmatprep.subr.mxu0 0.0
  %765 = vmatpush1.msra.mxu0 0.0
  %766 = vmatprep.subr.mxu0 0.0
  %767 = vmatpush1.msra.mxu0 0.0
  %768 = vmatprep.subr.mxu0 0.0
  %769 = vmatpush1.msra.mxu0 0.0
  %770 = vmatprep.subr.mxu0 0.0
  %771 = vmatpush1.msra.mxu0 0.0
  %772 = vmatprep.subr.mxu0 0.0
  %773 = vmatpush1.msra.mxu0 0.0
  %774 = vmatprep.subr.mxu0 0.0
  %775 = vmatpush1.msra.mxu0 0.0
  %776 = vmatprep.subr.mxu0 0.0
  %777 = vmatpush1.msra.mxu0 0.0
  %778 = vmatprep.subr.mxu0 0.0
  %779 = vmatpush1.msra.mxu0 0.0
  %780 = vmatprep.subr.mxu0 0.0
  %781 = vmatpush1.msra.mxu0 0.0
  %782 = vmatprep.subr.mxu0 0.0
  %783 = vmatpush1.msra.mxu0 0.0
  %784 = vmatprep.subr.mxu0 0.0
  %v785 = vand.u32 %v498, 4294901760
  %786 = vmatpush1.msra.mxu0 %v785
  %787 = vmatprep.subr.mxu0 0.0
  %v788 = vand.u32 %v497, 4294901760
  %789 = vmatpush1.msra.mxu0 %v788
  %790 = vmatprep.subr.mxu0 0.0
  %v791 = vand.u32 %v496, 4294901760
  %792 = vmatpush1.msra.mxu0 %v791
  %793 = vmatprep.subr.mxu0 0.0
  %v794 = vand.u32 %v495, 4294901760
  %795 = vmatpush1.msra.mxu0 %v794
  %796 = vmatprep.subr.mxu0 0.0
  %797 = vmatpush2.msra.mxu0 0.0
  %798 = vmatprep.subr.mxu0 0.0
  %799 = vmatpush2.msra.mxu0 0.0
  %800 = vmatprep.subr.mxu0 0.0
  %801 = vmatpush2.msra.mxu0 0.0
  %802 = vmatprep.subr.mxu0 0.0
  %803 = vmatpush2.msra.mxu0 0.0
  %804 = vmatprep.subr.mxu0 0.0
  %805 = vmatpush2.msra.mxu0 0.0
  %806 = vmatprep.subr.mxu0 0.0
  %807 = vmatpush2.msra.mxu0 0.0
  %808 = vmatprep.subr.mxu0 0.0
  %809 = vmatpush2.msra.mxu0 0.0
  %810 = vmatprep.subr.mxu0 0.0
  %811 = vmatpush2.msra.mxu0 0.0
  %812 = vmatprep.subr.mxu0 0.0
  %813 = vmatpush2.msra.mxu0 0.0
  %814 = vmatprep.subr.mxu0 0.0
  %815 = vmatpush2.msra.mxu0 0.0
  %816 = vmatprep.subr.mxu0 0.0
  %817 = vmatpush2.msra.mxu0 0.0
  %818 = vmatprep.subr.mxu0 0.0
  %819 = vmatpush2.msra.mxu0 0.0
  %820 = vmatprep.subr.mxu0 0.0
  %821 = vmatpush2.msra.mxu0 0.0
  %822 = vmatprep.subr.mxu0 0.0
  %823 = vmatpush2.msra.mxu0 0.0
  %824 = vmatprep.subr.mxu0 0.0
  %825 = vmatpush2.msra.mxu0 0.0
  %826 = vmatprep.subr.mxu0 0.0
  %827 = vmatpush2.msra.mxu0 0.0
  %828 = vmatprep.mubr.f32.mxu0 0.0
  %v829 = vand.u32 %v508, 4294901760
  %v830 = vsub.f32 %v508, %v829
  %v831 = vand.u32 %v830, 4294901760
  %832 = vmatmul.mubr.f32.gmra.mxu0 %v831
  %v833 = vpop.f32.mrf.mxu0
  %v834 = vadd.f32 %v757, %v833
  %v835 = vpop.f32.mrf.mxu0
  %836 = vdwg.mxu0
  %837 = vmatprep.subr.mxu0 0.0
  %838 = vmatpush1.msra.mxu0 0.0
  %839 = vmatprep.subr.mxu0 0.0
  %840 = vmatpush1.msra.mxu0 0.0
  %841 = vmatprep.subr.mxu0 0.0
  %842 = vmatpush1.msra.mxu0 0.0
  %843 = vmatprep.subr.mxu0 0.0
  %844 = vmatpush1.msra.mxu0 0.0
  %845 = vmatprep.subr.mxu0 0.0
  %846 = vmatpush1.msra.mxu0 0.0
  %847 = vmatprep.subr.mxu0 0.0
  %848 = vmatpush1.msra.mxu0 0.0
  %849 = vmatprep.subr.mxu0 0.0
  %850 = vmatpush1.msra.mxu0 0.0
  %851 = vmatprep.subr.mxu0 0.0
  %852 = vmatpush1.msra.mxu0 0.0
  %853 = vmatprep.subr.mxu0 0.0
  %854 = vmatpush1.msra.mxu0 0.0
  %855 = vmatprep.subr.mxu0 0.0
  %856 = vmatpush1.msra.mxu0 0.0
  %857 = vmatprep.subr.mxu0 0.0
  %858 = vmatpush1.msra.mxu0 0.0
  %859 = vmatprep.subr.mxu0 0.0
  %860 = vmatpush1.msra.mxu0 0.0
  %861 = vmatprep.subr.mxu0 0.0
  %v862 = vand.u32 %v498, 4294901760
  %v863 = vsub.f32 %v498, %v862
  %v864 = vand.u32 %v863, 4294901760
  %865 = vmatpush1.msra.mxu0 %v864
  %866 = vmatprep.subr.mxu0 0.0
  %v867 = vand.u32 %v497, 4294901760
  %v868 = vsub.f32 %v497, %v867
  %v869 = vand.u32 %v868, 4294901760
  %870 = vmatpush1.msra.mxu0 %v869
  %871 = vmatprep.subr.mxu0 0.0
  %v872 = vand.u32 %v496, 4294901760
  %v873 = vsub.f32 %v496, %v872
  %v874 = vand.u32 %v873, 4294901760
  %875 = vmatpush1.msra.mxu0 %v874
  %876 = vmatprep.subr.mxu0 0.0
  %v877 = vand.u32 %v495, 4294901760
  %v878 = vsub.f32 %v495, %v877
  %v879 = vand.u32 %v878, 4294901760
  %880 = vmatpush1.msra.mxu0 %v879
  %881 = vmatprep.subr.mxu0 0.0
  %882 = vmatpush2.msra.mxu0 0.0
  %883 = vmatprep.subr.mxu0 0.0
  %884 = vmatpush2.msra.mxu0 0.0
  %885 = vmatprep.subr.mxu0 0.0
  %886 = vmatpush2.msra.mxu0 0.0
  %887 = vmatprep.subr.mxu0 0.0
  %888 = vmatpush2.msra.mxu0 0.0
  %889 = vmatprep.subr.mxu0 0.0
  %890 = vmatpush2.msra.mxu0 0.0
  %891 = vmatprep.subr.mxu0 0.0
  %892 = vmatpush2.msra.mxu0 0.0
  %893 = vmatprep.subr.mxu0 0.0
  %894 = vmatpush2.msra.mxu0 0.0
  %895 = vmatprep.subr.mxu0 0.0
  %896 = vmatpush2.msra.mxu0 0.0
  %897 = vmatprep.subr.mxu0 0.0
  %898 = vmatpush2.msra.mxu0 0.0
  %899 = vmatprep.subr.mxu0 0.0
  %900 = vmatpush2.msra.mxu0 0.0
  %901 = vmatprep.subr.mxu0 0.0
  %902 = vmatpush2.msra.mxu0 0.0
  %903 = vmatprep.subr.mxu0 0.0
  %904 = vmatpush2.msra.mxu0 0.0
  %905 = vmatprep.subr.mxu0 0.0
  %906 = vmatpush2.msra.mxu0 0.0
  %907 = vmatprep.subr.mxu0 0.0
  %908 = vmatpush2.msra.mxu0 0.0
  %909 = vmatprep.subr.mxu0 0.0
  %910 = vmatpush2.msra.mxu0 0.0
  %911 = vmatprep.subr.mxu0 0.0
  %912 = vmatpush2.msra.mxu0 0.0
  %913 = vmatprep.mubr.f32.mxu0 0.0
  %v914 = vand.u32 %v508, 4294901760
  %915 = vmatmul.mubr.f32.gmra.mxu0 %v914
  %v916 = vpop.f32.mrf.mxu0
  %v917 = vadd.f32 %v834, %v916
  %v918 = vpop.f32.mrf.mxu0
  %919 = vdwg.mxu0
  %920 = vmatprep.subr.mxu0 0.0
  %921 = vmatpush1.msra.mxu0 0.0
  %922 = vmatprep.subr.mxu0 0.0
  %923 = vmatpush1.msra.mxu0 0.0
  %924 = vmatprep.subr.mxu0 0.0
  %925 = vmatpush1.msra.mxu0 0.0
  %926 = vmatprep.subr.mxu0 0.0
  %927 = vmatpush1.msra.mxu0 0.0
  %928 = vmatprep.subr.mxu0 0.0
  %929 = vmatpush1.msra.mxu0 0.0
  %930 = vmatprep.subr.mxu0 0.0
  %931 = vmatpush1.msra.mxu0 0.0
  %932 = vmatprep.subr.mxu0 0.0
  %933 = vmatpush1.msra.mxu0 0.0
  %934 = vmatprep.subr.mxu0 0.0
  %935 = vmatpush1.msra.mxu0 0.0
  %936 = vmatprep.subr.mxu0 0.0
  %937 = vmatpush1.msra.mxu0 0.0
  %938 = vmatprep.subr.mxu0 0.0
  %939 = vmatpush1.msra.mxu0 0.0
  %940 = vmatprep.subr.mxu0 0.0
  %941 = vmatpush1.msra.mxu0 0.0
  %942 = vmatprep.subr.mxu0 0.0
  %943 = vmatpush1.msra.mxu0 0.0
  %944 = vmatprep.subr.mxu0 0.0
  %v945 = vand.u32 %v498, 4294901760
  %946 = vmatpush1.msra.mxu0 %v945
  %947 = vmatprep.subr.mxu0 0.0
  %v948 = vand.u32 %v497, 4294901760
  %949 = vmatpush1.msra.mxu0 %v948
  %950 = vmatprep.subr.mxu0 0.0
  %v951 = vand.u32 %v496, 4294901760
  %952 = vmatpush1.msra.mxu0 %v951
  %953 = vmatprep.subr.mxu0 0.0
  %v954 = vand.u32 %v495, 4294901760
  %955 = vmatpush1.msra.mxu0 %v954
  %956 = vmatprep.subr.mxu0 0.0
  %957 = vmatpush2.msra.mxu0 0.0
  %958 = vmatprep.subr.mxu0 0.0
  %959 = vmatpush2.msra.mxu0 0.0
  %960 = vmatprep.subr.mxu0 0.0
  %961 = vmatpush2.msra.mxu0 0.0
  %962 = vmatprep.subr.mxu0 0.0
  %963 = vmatpush2.msra.mxu0 0.0
  %964 = vmatprep.subr.mxu0 0.0
  %965 = vmatpush2.msra.mxu0 0.0
  %966 = vmatprep.subr.mxu0 0.0
  %967 = vmatpush2.msra.mxu0 0.0
  %968 = vmatprep.subr.mxu0 0.0
  %969 = vmatpush2.msra.mxu0 0.0
  %970 = vmatprep.subr.mxu0 0.0
  %971 = vmatpush2.msra.mxu0 0.0
  %972 = vmatprep.subr.mxu0 0.0
  %973 = vmatpush2.msra.mxu0 0.0
  %974 = vmatprep.subr.mxu0 0.0
  %975 = vmatpush2.msra.mxu0 0.0
  %976 = vmatprep.subr.mxu0 0.0
  %977 = vmatpush2.msra.mxu0 0.0
  %978 = vmatprep.subr.mxu0 0.0
  %979 = vmatpush2.msra.mxu0 0.0
  %980 = vmatprep.subr.mxu0 0.0
  %981 = vmatpush2.msra.mxu0 0.0
  %982 = vmatprep.subr.mxu0 0.0
  %983 = vmatpush2.msra.mxu0 0.0
  %984 = vmatprep.subr.mxu0 0.0
  %985 = vmatpush2.msra.mxu0 0.0
  %986 = vmatprep.subr.mxu0 0.0
  %987 = vmatpush2.msra.mxu0 0.0
  %988 = vmatprep.mubr.f32.mxu0 0.0
  %v989 = vand.u32 %v508, 4294901760
  %990 = vmatmul.mubr.f32.gmra.mxu0 %v989
  %v991 = vpop.f32.mrf.mxu0
  %v992 = vadd.f32 %v917, %v991
  %v993 = vpop.f32.mrf.mxu0
  %994 = vdwg.mxu0
  %v995 = vmax.f32 %v992, 0.0
  %v996 = vld [vmem:[%s6] sm:$0xff]
  %v997 = vld [vmem:[%s6 + $0x8] sm:$0xff]
  %v998 = vld [vmem:[%s6 + $0x10] sm:$0xff]
  %v999 = vld [vmem:[%s6 + $0x18] sm:$0xff]
  %v1000 = vld [vmem:[%s7] sm:$0x1]
  %v1002 = vlaneseq
  %v1003 = vshrl.u32 %v1002, 7
  %v1004 = vsub.s32 0, %v1003
  %v1005 = vrot.slane %v1000, %v1004
  %v1008 = vsel %vm506, %v995, 0
  %1010 = vmatprep.subr.mxu0 0.0
  %1011 = vmatpush1.msra.mxu0 0.0
  %1012 = vmatprep.subr.mxu0 0.0
  %1013 = vmatpush1.msra.mxu0 0.0
  %1014 = vmatprep.subr.mxu0 0.0
  %1015 = vmatpush1.msra.mxu0 0.0
  %1016 = vmatprep.subr.mxu0 0.0
  %1017 = vmatpush1.msra.mxu0 0.0
  %1018 = vmatprep.subr.mxu0 0.0
  %1019 = vmatpush1.msra.mxu0 0.0
  %1020 = vmatprep.subr.mxu0 0.0
  %1021 = vmatpush1.msra.mxu0 0.0
  %1022 = vmatprep.subr.mxu0 0.0
  %1023 = vmatpush1.msra.mxu0 0.0
  %1024 = vmatprep.subr.mxu0 0.0
  %1025 = vmatpush1.msra.mxu0 0.0
  %1026 = vmatprep.subr.mxu0 0.0
  %1027 = vmatpush1.msra.mxu0 0.0
  %1028 = vmatprep.subr.mxu0 0.0
  %1029 = vmatpush1.msra.mxu0 0.0
  %1030 = vmatprep.subr.mxu0 0.0
  %1031 = vmatpush1.msra.mxu0 0.0
  %1032 = vmatprep.subr.mxu0 0.0
  %1033 = vmatpush1.msra.mxu0 0.0
  %1034 = vmatprep.subr.mxu0 0.0
  %v1035 = vand.u32 %v999, 4294901760
  %1036 = vmatpush1.msra.mxu0 %v1035
  %1037 = vmatprep.subr.mxu0 0.0
  %v1038 = vand.u32 %v998, 4294901760
  %1039 = vmatpush1.msra.mxu0 %v1038
  %1040 = vmatprep.subr.mxu0 0.0
  %v1041 = vand.u32 %v997, 4294901760
  %1042 = vmatpush1.msra.mxu0 %v1041
  %1043 = vmatprep.subr.mxu0 0.0
  %v1044 = vand.u32 %v996, 4294901760
  %1045 = vmatpush1.msra.mxu0 %v1044
  %1046 = vmatprep.subr.mxu0 0.0
  %1047 = vmatpush2.msra.mxu0 0.0
  %1048 = vmatprep.subr.mxu0 0.0
  %1049 = vmatpush2.msra.mxu0 0.0
  %1050 = vmatprep.subr.mxu0 0.0
  %1051 = vmatpush2.msra.mxu0 0.0
  %1052 = vmatprep.subr.mxu0 0.0
  %1053 = vmatpush2.msra.mxu0 0.0
  %1054 = vmatprep.subr.mxu0 0.0
  %1055 = vmatpush2.msra.mxu0 0.0
  %1056 = vmatprep.subr.mxu0 0.0
  %1057 = vmatpush2.msra.mxu0 0.0
  %1058 = vmatprep.subr.mxu0 0.0
  %1059 = vmatpush2.msra.mxu0 0.0
  %1060 = vmatprep.subr.mxu0 0.0
  %1061 = vmatpush2.msra.mxu0 0.0
  %1062 = vmatprep.subr.mxu0 0.0
  %1063 = vmatpush2.msra.mxu0 0.0
  %1064 = vmatprep.subr.mxu0 0.0
  %1065 = vmatpush2.msra.mxu0 0.0
  %1066 = vmatprep.subr.mxu0 0.0
  %1067 = vmatpush2.msra.mxu0 0.0
  %1068 = vmatprep.subr.mxu0 0.0
  %1069 = vmatpush2.msra.mxu0 0.0
  %1070 = vmatprep.subr.mxu0 0.0
  %1071 = vmatpush2.msra.mxu0 0.0
  %1072 = vmatprep.subr.mxu0 0.0
  %1073 = vmatpush2.msra.mxu0 0.0
  %1074 = vmatprep.subr.mxu0 0.0
  %1075 = vmatpush2.msra.mxu0 0.0
  %1076 = vmatprep.subr.mxu0 0.0
  %1077 = vmatpush2.msra.mxu0 0.0
  %1078 = vmatprep.mubr.f32.mxu0 0.0
  %v1079 = vand.u32 %v1008, 4294901760
  %v1080 = vsub.f32 %v1008, %v1079
  %v1081 = vand.u32 %v1080, 4294901760
  %v1082 = vsub.f32 %v1080, %v1081
  %v1083 = vand.u32 %v1082, 4294901760
  %1084 = vmatmul.mubr.f32.gmra.mxu0 %v1083
  %v1085 = vpop.f32.mrf.mxu0
  %v1086 = vadd.f32 %v1005, %v1085
  %v1087 = vpop.f32.mrf.mxu0
  %1088 = vdwg.mxu0
  %1089 = vmatprep.subr.mxu0 0.0
  %1090 = vmatpush1.msra.mxu0 0.0
  %1091 = vmatprep.subr.mxu0 0.0
  %1092 = vmatpush1.msra.mxu0 0.0
  %1093 = vmatprep.subr.mxu0 0.0
  %1094 = vmatpush1.msra.mxu0 0.0
  %1095 = vmatprep.subr.mxu0 0.0
  %1096 = vmatpush1.msra.mxu0 0.0
  %1097 = vmatprep.subr.mxu0 0.0
  %1098 = vmatpush1.msra.mxu0 0.0
  %1099 = vmatprep.subr.mxu0 0.0
  %1100 = vmatpush1.msra.mxu0 0.0
  %1101 = vmatprep.subr.mxu0 0.0
  %1102 = vmatpush1.msra.mxu0 0.0
  %1103 = vmatprep.subr.mxu0 0.0
  %1104 = vmatpush1.msra.mxu0 0.0
  %1105 = vmatprep.subr.mxu0 0.0
  %1106 = vmatpush1.msra.mxu0 0.0
  %1107 = vmatprep.subr.mxu0 0.0
  %1108 = vmatpush1.msra.mxu0 0.0
  %1109 = vmatprep.subr.mxu0 0.0
  %1110 = vmatpush1.msra.mxu0 0.0
  %1111 = vmatprep.subr.mxu0 0.0
  %1112 = vmatpush1.msra.mxu0 0.0
  %1113 = vmatprep.subr.mxu0 0.0
  %v1114 = vand.u32 %v999, 4294901760
  %v1115 = vsub.f32 %v999, %v1114
  %v1116 = vand.u32 %v1115, 4294901760
  %v1117 = vsub.f32 %v1115, %v1116
  %v1118 = vand.u32 %v1117, 4294901760
  %1119 = vmatpush1.msra.mxu0 %v1118
  %1120 = vmatprep.subr.mxu0 0.0
  %v1121 = vand.u32 %v998, 4294901760
  %v1122 = vsub.f32 %v998, %v1121
  %v1123 = vand.u32 %v1122, 4294901760
  %v1124 = vsub.f32 %v1122, %v1123
  %v1125 = vand.u32 %v1124, 4294901760
  %1126 = vmatpush1.msra.mxu0 %v1125
  %1127 = vmatprep.subr.mxu0 0.0
  %v1128 = vand.u32 %v997, 4294901760
  %v1129 = vsub.f32 %v997, %v1128
  %v1130 = vand.u32 %v1129, 4294901760
  %v1131 = vsub.f32 %v1129, %v1130
  %v1132 = vand.u32 %v1131, 4294901760
  %1133 = vmatpush1.msra.mxu0 %v1132
  %1134 = vmatprep.subr.mxu0 0.0
  %v1135 = vand.u32 %v996, 4294901760
  %v1136 = vsub.f32 %v996, %v1135
  %v1137 = vand.u32 %v1136, 4294901760
  %v1138 = vsub.f32 %v1136, %v1137
  %v1139 = vand.u32 %v1138, 4294901760
  %1140 = vmatpush1.msra.mxu0 %v1139
  %1141 = vmatprep.subr.mxu0 0.0
  %1142 = vmatpush2.msra.mxu0 0.0
  %1143 = vmatprep.subr.mxu0 0.0
  %1144 = vmatpush2.msra.mxu0 0.0
  %1145 = vmatprep.subr.mxu0 0.0
  %1146 = vmatpush2.msra.mxu0 0.0
  %1147 = vmatprep.subr.mxu0 0.0
  %1148 = vmatpush2.msra.mxu0 0.0
  %1149 = vmatprep.subr.mxu0 0.0
  %1150 = vmatpush2.msra.mxu0 0.0
  %1151 = vmatprep.subr.mxu0 0.0
  %1152 = vmatpush2.msra.mxu0 0.0
  %1153 = vmatprep.subr.mxu0 0.0
  %1154 = vmatpush2.msra.mxu0 0.0
  %1155 = vmatprep.subr.mxu0 0.0
  %1156 = vmatpush2.msra.mxu0 0.0
  %1157 = vmatprep.subr.mxu0 0.0
  %1158 = vmatpush2.msra.mxu0 0.0
  %1159 = vmatprep.subr.mxu0 0.0
  %1160 = vmatpush2.msra.mxu0 0.0
  %1161 = vmatprep.subr.mxu0 0.0
  %1162 = vmatpush2.msra.mxu0 0.0
  %1163 = vmatprep.subr.mxu0 0.0
  %1164 = vmatpush2.msra.mxu0 0.0
  %1165 = vmatprep.subr.mxu0 0.0
  %1166 = vmatpush2.msra.mxu0 0.0
  %1167 = vmatprep.subr.mxu0 0.0
  %1168 = vmatpush2.msra.mxu0 0.0
  %1169 = vmatprep.subr.mxu0 0.0
  %1170 = vmatpush2.msra.mxu0 0.0
  %1171 = vmatprep.subr.mxu0 0.0
  %1172 = vmatpush2.msra.mxu0 0.0
  %1173 = vmatprep.mubr.f32.mxu0 0.0
  %v1174 = vand.u32 %v1008, 4294901760
  %1175 = vmatmul.mubr.f32.gmra.mxu0 %v1174
  %v1176 = vpop.f32.mrf.mxu0
  %v1177 = vadd.f32 %v1086, %v1176
  %v1178 = vpop.f32.mrf.mxu0
  %1179 = vdwg.mxu0
  %1180 = vmatprep.subr.mxu0 0.0
  %1181 = vmatpush1.msra.mxu0 0.0
  %1182 = vmatprep.subr.mxu0 0.0
  %1183 = vmatpush1.msra.mxu0 0.0
  %1184 = vmatprep.subr.mxu0 0.0
  %1185 = vmatpush1.msra.mxu0 0.0
  %1186 = vmatprep.subr.mxu0 0.0
  %1187 = vmatpush1.msra.mxu0 0.0
  %1188 = vmatprep.subr.mxu0 0.0
  %1189 = vmatpush1.msra.mxu0 0.0
  %1190 = vmatprep.subr.mxu0 0.0
  %1191 = vmatpush1.msra.mxu0 0.0
  %1192 = vmatprep.subr.mxu0 0.0
  %1193 = vmatpush1.msra.mxu0 0.0
  %1194 = vmatprep.subr.mxu0 0.0
  %1195 = vmatpush1.msra.mxu0 0.0
  %1196 = vmatprep.subr.mxu0 0.0
  %1197 = vmatpush1.msra.mxu0 0.0
  %1198 = vmatprep.subr.mxu0 0.0
  %1199 = vmatpush1.msra.mxu0 0.0
  %1200 = vmatprep.subr.mxu0 0.0
  %1201 = vmatpush1.msra.mxu0 0.0
  %1202 = vmatprep.subr.mxu0 0.0
  %1203 = vmatpush1.msra.mxu0 0.0
  %1204 = vmatprep.subr.mxu0 0.0
  %v1205 = vand.u32 %v999, 4294901760
  %v1206 = vsub.f32 %v999, %v1205
  %1207 = vmatpush1.msra.mxu0 %v1206
  %1208 = vmatprep.subr.mxu0 0.0
  %v1209 = vand.u32 %v998, 4294901760
  %v1210 = vsub.f32 %v998, %v1209
  %1211 = vmatpush1.msra.mxu0 %v1210
  %1212 = vmatprep.subr.mxu0 0.0
  %v1213 = vand.u32 %v997, 4294901760
  %v1214 = vsub.f32 %v997, %v1213
  %1215 = vmatpush1.msra.mxu0 %v1214
  %1216 = vmatprep.subr.mxu0 0.0
  %v1217 = vand.u32 %v996, 4294901760
  %v1218 = vsub.f32 %v996, %v1217
  %1219 = vmatpush1.msra.mxu0 %v1218
  %1220 = vmatprep.subr.mxu0 0.0
  %1221 = vmatpush2.msra.mxu0 0.0
  %1222 = vmatprep.subr.mxu0 0.0
  %1223 = vmatpush2.msra.mxu0 0.0
  %1224 = vmatprep.subr.mxu0 0.0
  %1225 = vmatpush2.msra.mxu0 0.0
  %1226 = vmatprep.subr.mxu0 0.0
  %1227 = vmatpush2.msra.mxu0 0.0
  %1228 = vmatprep.subr.mxu0 0.0
  %1229 = vmatpush2.msra.mxu0 0.0
  %1230 = vmatprep.subr.mxu0 0.0
  %1231 = vmatpush2.msra.mxu0 0.0
  %1232 = vmatprep.subr.mxu0 0.0
  %1233 = vmatpush2.msra.mxu0 0.0
  %1234 = vmatprep.subr.mxu0 0.0
  %1235 = vmatpush2.msra.mxu0 0.0
  %1236 = vmatprep.subr.mxu0 0.0
  %1237 = vmatpush2.msra.mxu0 0.0
  %1238 = vmatprep.subr.mxu0 0.0
  %1239 = vmatpush2.msra.mxu0 0.0
  %1240 = vmatprep.subr.mxu0 0.0
  %1241 = vmatpush2.msra.mxu0 0.0
  %1242 = vmatprep.subr.mxu0 0.0
  %1243 = vmatpush2.msra.mxu0 0.0
  %1244 = vmatprep.subr.mxu0 0.0
  %1245 = vmatpush2.msra.mxu0 0.0
  %1246 = vmatprep.subr.mxu0 0.0
  %1247 = vmatpush2.msra.mxu0 0.0
  %1248 = vmatprep.subr.mxu0 0.0
  %1249 = vmatpush2.msra.mxu0 0.0
  %1250 = vmatprep.subr.mxu0 0.0
  %1251 = vmatpush2.msra.mxu0 0.0
  %1252 = vmatprep.mubr.f32.mxu0 0.0
  %v1253 = vand.u32 %v1008, 4294901760
  %v1254 = vsub.f32 %v1008, %v1253
  %1255 = vmatmul.mubr.f32.gmra.mxu0 %v1254
  %v1256 = vpop.f32.mrf.mxu0
  %v1257 = vadd.f32 %v1177, %v1256
  %v1258 = vpop.f32.mrf.mxu0
  %1259 = vdwg.mxu0
  %1260 = vmatprep.subr.mxu0 0.0
  %1261 = vmatpush1.msra.mxu0 0.0
  %1262 = vmatprep.subr.mxu0 0.0
  %1263 = vmatpush1.msra.mxu0 0.0
  %1264 = vmatprep.subr.mxu0 0.0
  %1265 = vmatpush1.msra.mxu0 0.0
  %1266 = vmatprep.subr.mxu0 0.0
  %1267 = vmatpush1.msra.mxu0 0.0
  %1268 = vmatprep.subr.mxu0 0.0
  %1269 = vmatpush1.msra.mxu0 0.0
  %1270 = vmatprep.subr.mxu0 0.0
  %1271 = vmatpush1.msra.mxu0 0.0
  %1272 = vmatprep.subr.mxu0 0.0
  %1273 = vmatpush1.msra.mxu0 0.0
  %1274 = vmatprep.subr.mxu0 0.0
  %1275 = vmatpush1.msra.mxu0 0.0
  %1276 = vmatprep.subr.mxu0 0.0
  %1277 = vmatpush1.msra.mxu0 0.0
  %1278 = vmatprep.subr.mxu0 0.0
  %1279 = vmatpush1.msra.mxu0 0.0
  %1280 = vmatprep.subr.mxu0 0.0
  %1281 = vmatpush1.msra.mxu0 0.0
  %1282 = vmatprep.subr.mxu0 0.0
  %1283 = vmatpush1.msra.mxu0 0.0
  %1284 = vmatprep.subr.mxu0 0.0
  %v1285 = vand.u32 %v999, 4294901760
  %1286 = vmatpush1.msra.mxu0 %v1285
  %1287 = vmatprep.subr.mxu0 0.0
  %v1288 = vand.u32 %v998, 4294901760
  %1289 = vmatpush1.msra.mxu0 %v1288
  %1290 = vmatprep.subr.mxu0 0.0
  %v1291 = vand.u32 %v997, 4294901760
  %1292 = vmatpush1.msra.mxu0 %v1291
  %1293 = vmatprep.subr.mxu0 0.0
  %v1294 = vand.u32 %v996, 4294901760
  %1295 = vmatpush1.msra.mxu0 %v1294
  %1296 = vmatprep.subr.mxu0 0.0
  %1297 = vmatpush2.msra.mxu0 0.0
  %1298 = vmatprep.subr.mxu0 0.0
  %1299 = vmatpush2.msra.mxu0 0.0
  %1300 = vmatprep.subr.mxu0 0.0
  %1301 = vmatpush2.msra.mxu0 0.0
  %1302 = vmatprep.subr.mxu0 0.0
  %1303 = vmatpush2.msra.mxu0 0.0
  %1304 = vmatprep.subr.mxu0 0.0
  %1305 = vmatpush2.msra.mxu0 0.0
  %1306 = vmatprep.subr.mxu0 0.0
  %1307 = vmatpush2.msra.mxu0 0.0
  %1308 = vmatprep.subr.mxu0 0.0
  %1309 = vmatpush2.msra.mxu0 0.0
  %1310 = vmatprep.subr.mxu0 0.0
  %1311 = vmatpush2.msra.mxu0 0.0
  %1312 = vmatprep.subr.mxu0 0.0
  %1313 = vmatpush2.msra.mxu0 0.0
  %1314 = vmatprep.subr.mxu0 0.0
  %1315 = vmatpush2.msra.mxu0 0.0
  %1316 = vmatprep.subr.mxu0 0.0
  %1317 = vmatpush2.msra.mxu0 0.0
  %1318 = vmatprep.subr.mxu0 0.0
  %1319 = vmatpush2.msra.mxu0 0.0
  %1320 = vmatprep.subr.mxu0 0.0
  %1321 = vmatpush2.msra.mxu0 0.0
  %1322 = vmatprep.subr.mxu0 0.0
  %1323 = vmatpush2.msra.mxu0 0.0
  %1324 = vmatprep.subr.mxu0 0.0
  %1325 = vmatpush2.msra.mxu0 0.0
  %1326 = vmatprep.subr.mxu0 0.0
  %1327 = vmatpush2.msra.mxu0 0.0
  %1328 = vmatprep.mubr.f32.mxu0 0.0
  %v1329 = vand.u32 %v1008, 4294901760
  %v1330 = vsub.f32 %v1008, %v1329
  %v1331 = vand.u32 %v1330, 4294901760
  %1332 = vmatmul.mubr.f32.gmra.mxu0 %v1331
  %v1333 = vpop.f32.mrf.mxu0
  %v1334 = vadd.f32 %v1257, %v1333
  %v1335 = vpop.f32.mrf.mxu0
  %1336 = vdwg.mxu0
  %1337 = vmatprep.subr.mxu0 0.0
  %1338 = vmatpush1.msra.mxu0 0.0
  %1339 = vmatprep.subr.mxu0 0.0
  %1340 = vmatpush1.msra.mxu0 0.0
  %1341 = vmatprep.subr.mxu0 0.0
  %1342 = vmatpush1.msra.mxu0 0.0
  %1343 = vmatprep.subr.mxu0 0.0
  %1344 = vmatpush1.msra.mxu0 0.0
  %1345 = vmatprep.subr.mxu0 0.0
  %1346 = vmatpush1.msra.mxu0 0.0
  %1347 = vmatprep.subr.mxu0 0.0
  %1348 = vmatpush1.msra.mxu0 0.0
  %1349 = vmatprep.subr.mxu0 0.0
  %1350 = vmatpush1.msra.mxu0 0.0
  %1351 = vmatprep.subr.mxu0 0.0
  %1352 = vmatpush1.msra.mxu0 0.0
  %1353 = vmatprep.subr.mxu0 0.0
  %1354 = vmatpush1.msra.mxu0 0.0
  %1355 = vmatprep.subr.mxu0 0.0
  %1356 = vmatpush1.msra.mxu0 0.0
  %1357 = vmatprep.subr.mxu0 0.0
  %1358 = vmatpush1.msra.mxu0 0.0
  %1359 = vmatprep.subr.mxu0 0.0
  %1360 = vmatpush1.msra.mxu0 0.0
  %1361 = vmatprep.subr.mxu0 0.0
  %v1362 = vand.u32 %v999, 4294901760
  %v1363 = vsub.f32 %v999, %v1362
  %v1364 = vand.u32 %v1363, 4294901760
  %1365 = vmatpush1.msra.mxu0 %v1364
  %1366 = vmatprep.subr.mxu0 0.0
  %v1367 = vand.u32 %v998, 4294901760
  %v1368 = vsub.f32 %v998, %v1367
  %v1369 = vand.u32 %v1368, 4294901760
  %1370 = vmatpush1.msra.mxu0 %v1369
  %1371 = vmatprep.subr.mxu0 0.0
  %v1372 = vand.u32 %v997, 4294901760
  %v1373 = vsub.f32 %v997, %v1372
  %v1374 = vand.u32 %v1373, 4294901760
  %1375 = vmatpush1.msra.mxu0 %v1374
  %1376 = vmatprep.subr.mxu0 0.0
  %v1377 = vand.u32 %v996, 4294901760
  %v1378 = vsub.f32 %v996, %v1377
  %v1379 = vand.u32 %v1378, 4294901760
  %1380 = vmatpush1.msra.mxu0 %v1379
  %1381 = vmatprep.subr.mxu0 0.0
  %1382 = vmatpush2.msra.mxu0 0.0
  %1383 = vmatprep.subr.mxu0 0.0
  %1384 = vmatpush2.msra.mxu0 0.0
  %1385 = vmatprep.subr.mxu0 0.0
  %1386 = vmatpush2.msra.mxu0 0.0
  %1387 = vmatprep.subr.mxu0 0.0
  %1388 = vmatpush2.msra.mxu0 0.0
  %1389 = vmatprep.subr.mxu0 0.0
  %1390 = vmatpush2.msra.mxu0 0.0
  %1391 = vmatprep.subr.mxu0 0.0
  %1392 = vmatpush2.msra.mxu0 0.0
  %1393 = vmatprep.subr.mxu0 0.0
  %1394 = vmatpush2.msra.mxu0 0.0
  %1395 = vmatprep.subr.mxu0 0.0
  %1396 = vmatpush2.msra.mxu0 0.0
  %1397 = vmatprep.subr.mxu0 0.0
  %1398 = vmatpush2.msra.mxu0 0.0
  %1399 = vmatprep.subr.mxu0 0.0
  %1400 = vmatpush2.msra.mxu0 0.0
  %1401 = vmatprep.subr.mxu0 0.0
  %1402 = vmatpush2.msra.mxu0 0.0
  %1403 = vmatprep.subr.mxu0 0.0
  %1404 = vmatpush2.msra.mxu0 0.0
  %1405 = vmatprep.subr.mxu0 0.0
  %1406 = vmatpush2.msra.mxu0 0.0
  %1407 = vmatprep.subr.mxu0 0.0
  %1408 = vmatpush2.msra.mxu0 0.0
  %1409 = vmatprep.subr.mxu0 0.0
  %1410 = vmatpush2.msra.mxu0 0.0
  %1411 = vmatprep.subr.mxu0 0.0
  %1412 = vmatpush2.msra.mxu0 0.0
  %1413 = vmatprep.mubr.f32.mxu0 0.0
  %v1414 = vand.u32 %v1008, 4294901760
  %1415 = vmatmul.mubr.f32.gmra.mxu0 %v1414
  %v1416 = vpop.f32.mrf.mxu0
  %v1417 = vadd.f32 %v1334, %v1416
  %v1418 = vpop.f32.mrf.mxu0
  %1419 = vdwg.mxu0
  %1420 = vmatprep.subr.mxu0 0.0
  %1421 = vmatpush1.msra.mxu0 0.0
  %1422 = vmatprep.subr.mxu0 0.0
  %1423 = vmatpush1.msra.mxu0 0.0
  %1424 = vmatprep.subr.mxu0 0.0
  %1425 = vmatpush1.msra.mxu0 0.0
  %1426 = vmatprep.subr.mxu0 0.0
  %1427 = vmatpush1.msra.mxu0 0.0
  %1428 = vmatprep.subr.mxu0 0.0
  %1429 = vmatpush1.msra.mxu0 0.0
  %1430 = vmatprep.subr.mxu0 0.0
  %1431 = vmatpush1.msra.mxu0 0.0
  %1432 = vmatprep.subr.mxu0 0.0
  %1433 = vmatpush1.msra.mxu0 0.0
  %1434 = vmatprep.subr.mxu0 0.0
  %1435 = vmatpush1.msra.mxu0 0.0
  %1436 = vmatprep.subr.mxu0 0.0
  %1437 = vmatpush1.msra.mxu0 0.0
  %1438 = vmatprep.subr.mxu0 0.0
  %1439 = vmatpush1.msra.mxu0 0.0
  %1440 = vmatprep.subr.mxu0 0.0
  %1441 = vmatpush1.msra.mxu0 0.0
  %1442 = vmatprep.subr.mxu0 0.0
  %1443 = vmatpush1.msra.mxu0 0.0
  %1444 = vmatprep.subr.mxu0 0.0
  %v1445 = vand.u32 %v999, 4294901760
  %1446 = vmatpush1.msra.mxu0 %v1445
  %1447 = vmatprep.subr.mxu0 0.0
  %v1448 = vand.u32 %v998, 4294901760
  %1449 = vmatpush1.msra.mxu0 %v1448
  %1450 = vmatprep.subr.mxu0 0.0
  %v1451 = vand.u32 %v997, 4294901760
  %1452 = vmatpush1.msra.mxu0 %v1451
  %1453 = vmatprep.subr.mxu0 0.0
  %v1454 = vand.u32 %v996, 4294901760
  %1455 = vmatpush1.msra.mxu0 %v1454
  %1456 = vmatprep.subr.mxu0 0.0
  %1457 = vmatpush2.msra.mxu0 0.0
  %1458 = vmatprep.subr.mxu0 0.0
  %1459 = vmatpush2.msra.mxu0 0.0
  %1460 = vmatprep.subr.mxu0 0.0
  %1461 = vmatpush2.msra.mxu0 0.0
  %1462 = vmatprep.subr.mxu0 0.0
  %1463 = vmatpush2.msra.mxu0 0.0
  %1464 = vmatprep.subr.mxu0 0.0
  %1465 = vmatpush2.msra.mxu0 0.0
  %1466 = vmatprep.subr.mxu0 0.0
  %1467 = vmatpush2.msra.mxu0 0.0
  %1468 = vmatprep.subr.mxu0 0.0
  %1469 = vmatpush2.msra.mxu0 0.0
  %1470 = vmatprep.subr.mxu0 0.0
  %1471 = vmatpush2.msra.mxu0 0.0
  %1472 = vmatprep.subr.mxu0 0.0
  %1473 = vmatpush2.msra.mxu0 0.0
  %1474 = vmatprep.subr.mxu0 0.0
  %1475 = vmatpush2.msra.mxu0 0.0
  %1476 = vmatprep.subr.mxu0 0.0
  %1477 = vmatpush2.msra.mxu0 0.0
  %1478 = vmatprep.subr.mxu0 0.0
  %1479 = vmatpush2.msra.mxu0 0.0
  %1480 = vmatprep.subr.mxu0 0.0
  %1481 = vmatpush2.msra.mxu0 0.0
  %1482 = vmatprep.subr.mxu0 0.0
  %1483 = vmatpush2.msra.mxu0 0.0
  %1484 = vmatprep.subr.mxu0 0.0
  %1485 = vmatpush2.msra.mxu0 0.0
  %1486 = vmatprep.subr.mxu0 0.0
  %1487 = vmatpush2.msra.mxu0 0.0
  %1488 = vmatprep.mubr.f32.mxu0 0.0
  %v1489 = vand.u32 %v1008, 4294901760
  %1490 = vmatmul.mubr.f32.gmra.mxu0 %v1489
  %v1491 = vpop.f32.mrf.mxu0
  %v1492 = vadd.f32 %v1417, %v1491
  %v1493 = vpop.f32.mrf.mxu0
  %1494 = vdwg.mxu0
  %vm1495 = vcmask 130048
  %v1496 = vsel %vm1495, %v1492, -inf
  %1497 = vmax.xlane.f32.xlu0 %v1496
  %v1498 = vpop.xlane.xlu0 %1497
  %v1499 = vsub.f32 %v1492, %v1498
  %v1500 = vmul.f32 %v1499, 1.442695
  %v1501 = vpow.pop %v1500
  %v1502 = vsel %vm1495, %v1501, 0.0
  %1503 = vadd.xlane.f32.xlu0 %v1502
  %v1504 = vpop.xlane.xlu0 %1503
  %v1505 = vrcp.pop %v1504
  %v1506 = vmul.f32 %v1501, %v1505
  %v1507 = vmul.f32 %v32, 8.0
  %v1508 = vfloor.f32 %v1507
  %v1509 = vsub.f32 %v1507, %v1508
  %v1510 = vcvt.f32.s32.to.zero.pseudo %v1508
  %v1511 = vlaneseq
  %v1512 = vand.u32 %v1511, 127
  %1513 = vset.pattern.permute.xlu0 0
  %1514 = vperm.xlu0 %1513, %v1510
  %v1515 = vpop.permute.xlu0 %1514
  %vm1516 = vcmp.eq.s32.totalorder %v1512, %v1515
  %v1517 = vsel %vm1516, %v1506, 0.0
  %v1518 = vsel %vm1495, %v1517, 0.0
  %1519 = vadd.xlane.f32.xlu0 %v1518
  %v1520 = vpop.xlane.xlu0 %1519
  %vm1521 = vcmp.lt.s32.totalorder %v1512, %v1515
  %v1522 = vsel %vm1521, %v1506, 0.0
  %v1523 = vsel %vm1495, %v1522, 0.0
  %1524 = vadd.xlane.f32.xlu0 %v1523
  %v1525 = vpop.xlane.xlu0 %1524
  %v1526 = vmul.f32 %v1509, %v1520
  %v1527 = vadd.f32 %v1526, %v1525
  %v1528 = vmul.f32 %v1520, 8.0
  %v1529 = vlog2.pop %v1528
  %v1530 = vmul.f32 %v1529, 0.6931472
  %v1531 = vadd.f32 %v1530, 0.0
  %1532 = vset.pattern.permute.xlu0 1
  %1533 = vperm.xlu0 %1532, %v1510
  %v1534 = vpop.permute.xlu0 %1533
  %vm1535 = vcmp.eq.s32.totalorder %v1512, %v1534
  %v1536 = vsel %vm1535, %v1506, 0.0
  %v1537 = vsel %vm1495, %v1536, 0.0
  %1538 = vadd.xlane.f32.xlu0 %v1537
  %v1539 = vpop.xlane.xlu0 %1538
  %vm1540 = vcmp.lt.s32.totalorder %v1512, %v1534
  %v1541 = vsel %vm1540, %v1506, 0.0
  %v1542 = vsel %vm1495, %v1541, 0.0
  %1543 = vadd.xlane.f32.xlu0 %v1542
  %v1544 = vpop.xlane.xlu0 %1543
  %v1545 = vmul.f32 %v1509, %v1539
  %v1546 = vadd.f32 %v1545, %v1544
  %v1547 = vmul.f32 %v1539, 8.0
  %v1548 = vlog2.pop %v1547
  %v1549 = vmul.f32 %v1548, 0.6931472
  %v1550 = vadd.f32 %v1531, %v1549
  %vm1551 = vcmask 7168
  %v1552 = vsel %vm1551, %v1527, %v1546
  %1553 = vst.msk [vmem:[%s8] sm:$0xff] %vm41, %v1552
  %1554 = vst.msk [vmem:[%s9] sm:$0xff] %vm1551, %v1550
  // Predicated region
  $region34: #{tpu_custom_call.1} parent=0 // pred_check
    _
  $region35: #{tpu_custom_call.1} parent=0 // pred_check_branch
    %1556 = sbr.rel (0) target = $region37
  $region36: #{tpu_custom_call.1} parent=0 // pred_region
    _
  $region37: #{tpu_custom_call.1} parent=0 // pred_fallthru
    _
  // Predicated region
  $region38: #{tpu_custom_call.1} parent=0 // pred_check
    _
  $region39: #{tpu_custom_call.1} parent=0 // pred_check_branch
    %1558 = sbr.rel (0) target = $region41
  $region40: #{tpu_custom_call.1} parent=0 // pred_region
    _
  $region41: #{tpu_custom_call.1} parent=0 // pred_fallthru
    _
  // Predicated region
  $region42: #{tpu_custom_call.1} parent=0 // pred_check
    _
  $region43: #{tpu_custom_call.1} parent=0 // pred_check_branch
    %1560 = sbr.rel (0) target = $region45
  $region44: #{tpu_custom_call.1} parent=0 // pred_region
    _
  $region45: #{tpu_custom_call.1} parent=0 // pred_fallthru
    _
  // Predicated region
  $region46: #{tpu_custom_call.1} parent=0 // pred_check
    _
  $region47: #{tpu_custom_call.1} parent=0 // pred_check_branch
    %1562 = sbr.rel (0) target = $region49
  $region48: #{tpu_custom_call.1} parent=0 // pred_region
    _
  $region49: #{tpu_custom_call.1} parent=0 // pred_fallthru
    _

</llo_original>
